<compile_context>
chip_gen: v7x
topology: tpu7x:2x2x1
jax: 0.10.0
libtpu: 0.0.40
codegen_flags: <defaults>
</compile_context>

<pallas_src>
import jax
import jax.numpy as jnp
from jax import lax
from jax.experimental import pallas as pl
from jax.experimental.pallas import tpu as pltpu

LN_EPS = 1e-5  # torch.nn.LayerNorm default

# Scaled-down analogue of the torch module (h_size 768 -> 128,
# scale1 512/2048 -> 64/256, scale2 256/1028 -> 32/64).
H = 128                 # encoder hidden size (stub)
D1, D1P = 64, 128       # scale1 out_features (actual / lane-padded)
F1 = 256                # scale1 pwff inner features
D2, D2P = 32, 128       # scale2 out_features (actual / lane-padded)
F2, F2P = 64, 128       # scale2 pwff inner features (actual / lane-padded)
NCLS = 2                # classifier outputs
OUTW = 128              # lane-dense output width (probs live in lanes 0..1)

# Row offsets inside the packed 128-wide weight slab.
_R_WS1 = 0
_R_WB1 = _R_WS1 + H          # 128
_R_WS2 = _R_WB1 + F1         # 384
_R_WA2 = _R_WS2 + D1P        # 512
_R_WB2 = _R_WA2 + D2P        # 640
_R_CLS = _R_WB2 + F2P        # 768
WROWS = _R_CLS + D2P         # 896
VROWS, VCOLS = 16, 256       # bias / LN / cls-bias slab


def _siamese_head_kernel(x_ref, w_ref, wa_ref, v_ref, o_ref):
    """TB batch elements per grid step: x_ref (TB, L, H) bf16 -> o_ref (TB, 128)."""
    TB, L, Hdim = x_ref.shape
    rows = TB * L
    x = x_ref[...].reshape(rows, Hdim)             # (TB*L, H) bf16, contiguous

    def vrow(r, width):
        return v_ref[r:r + 1, 0:width]             # (1, width) f32, static slice

    def scaling_layer(z_bf, ws, b, g, beta, wa, ba, wb, bb, d_actual):
        # ScalingLayer: h = Linear(z); y = h + W_b(relu(W_a(LayerNorm(h)))).
        # Feature dim is zero-padded to 128 lanes; LN stats use the true width
        # d_actual (padded lanes of h are exactly zero by construction).
        h = jnp.dot(z_bf, ws, preferred_element_type=jnp.float32) + b
        inv_d = 1.0 / d_actual
        mu = jnp.sum(h, axis=-1, keepdims=True) * inv_d
        var = jnp.maximum(
            jnp.sum(h * h, axis=-1, keepdims=True) * inv_d - mu * mu, 0.0)
        hn = (h - mu) * lax.rsqrt(var + LN_EPS) * g + beta     # padded lanes -> 0
        inter = jnp.maximum(
            jnp.dot(hn.astype(jnp.bfloat16), wa,
                    preferred_element_type=jnp.float32) + ba, 0.0)
        ff = jnp.dot(inter.astype(jnp.bfloat16), wb,
                     preferred_element_type=jnp.float32) + bb
        return ff + h                                          # (rows, 128) f32

    # scale1
    y = scaling_layer(
        x,
        w_ref[_R_WS1:_R_WB1, :], vrow(0, D1P), vrow(1, D1P), vrow(2, D1P),
        wa_ref[...], vrow(3, F1),
        w_ref[_R_WB1:_R_WS2, :], vrow(4, D1P),
        D1)
    # scale2
    y = scaling_layer(
        y.astype(jnp.bfloat16),
        w_ref[_R_WS2:_R_WA2, :], vrow(5, D2P), vrow(6, D2P), vrow(7, D2P),
        w_ref[_R_WA2:_R_WB2, :], vrow(8, F2P),
        w_ref[_R_WB2:_R_CLS, :], vrow(9, D2P),
        D2)

    # Eval mode: both towers consume bert_output1, so scaled1 + scaled2 == 2*y.
    # TODO(synk): if the encoder stub ever makes x1 != x2, batch-concat the two
    # towers into a (2B, L, D) tensor and run the tower once instead.
    y3 = y.reshape(TB, L, D2P)
    # torch: scaled[:, 1:].sum(dim=1) / sequence_length  (divides by L, not L-1).
    # Masked sum (position > 0) keeps everything tile-aligned; 2.0 folds in the
    # two-tower sum.
    keep = lax.broadcasted_iota(jnp.int32, (TB, L, D2P), 1) > 0
    pooled = jnp.sum(jnp.where(keep, y3, 0.0), axis=1) * (2.0 / L)   # (TB, D2P)

    # Classifier folded into the 128-lane padded scheme; padded logit lanes are
    # exactly 0 (zero-padded weights/bias).
    logits = jnp.dot(pooled.astype(jnp.bfloat16),
                     w_ref[_R_CLS:_R_CLS + D2P, :],
                     preferred_element_type=jnp.float32) + v_ref[10:11, 0:OUTW]

    # softmax(dim=1) over the 2 valid lanes only; padded lanes -> exactly 0.
    lane = lax.broadcasted_iota(jnp.int32, (TB, OUTW), 1)
    masked = jnp.where(lane < NCLS, logits, jnp.float32(-1e30))
    m = jnp.max(masked, axis=-1, keepdims=True)
    e = jnp.exp(masked - m)                         # padded lanes underflow to 0
    denom = jnp.sum(e, axis=-1, keepdims=True)
    o_ref[...] = e * pl.reciprocal(denom, approx=True)   # (TB, 128), lane-dense


def _pad2(w, rows, cols):
    return jnp.zeros((rows, cols), w.dtype).at[:w.shape[0], :w.shape[1]].set(w)


def pack_params(p):
    """Pack the 18 head parameters into 3 VMEM slabs (3 DMAs instead of ~20)."""
    wslab = jnp.concatenate([
        _pad2(p['s1_w'], H, 128),     # rows   0..128
        _pad2(p['s1_wb'], F1, 128),   # rows 128..384
        _pad2(p['s2_w'], D1P, 128),   # rows 384..512
        _pad2(p['s2_wa'], D2P, 128),  # rows 512..640
        _pad2(p['s2_wb'], F2P, 128),  # rows 640..768
        _pad2(p['cls_w'], D2P, 128),  # rows 768..896
    ], axis=0).astype(jnp.bfloat16)

    waslab = _pad2(p['s1_wa'], D1P, F1).astype(jnp.bfloat16)   # (128, 256)

    rows = [
        _pad2(p['s1_b'], 1, VCOLS), _pad2(p['s1_lng'], 1, VCOLS),
        _pad2(p['s1_lnb'], 1, VCOLS), _pad2(p['s1_ba'], 1, VCOLS),
        _pad2(p['s1_bb'], 1, VCOLS),
        _pad2(p['s2_b'], 1, VCOLS), _pad2(p['s2_lng'], 1, VCOLS),
        _pad2(p['s2_lnb'], 1, VCOLS), _pad2(p['s2_ba'], 1, VCOLS),
        _pad2(p['s2_bb'], 1, VCOLS),
        _pad2(p['cls_b'], 1, VCOLS),
    ]
    vslab = jnp.concatenate(
        rows + [jnp.zeros((VROWS - len(rows), VCOLS), jnp.float32)], axis=0)
    return wslab, waslab, vslab


def init_params(key, *, vocab=50, max_len=16):
    """Deterministic, scaled-down analogue of the torch module's parameters."""
    ks = jax.random.split(key, 16)

    def dense(k, i, o):
        return jax.random.normal(k, (i, o), jnp.float32) * 0.02

    def bias(k, o):
        return jax.random.normal(k, (1, o), jnp.float32) * 0.02

    return dict(
        emb=jax.random.normal(ks[0], (vocab, H), jnp.float32) * 0.02,
        pos=jax.random.normal(ks[1], (max_len, H), jnp.float32) * 0.02,
        s1_w=dense(ks[2], H, D1), s1_b=bias(ks[3], D1),
        s1_lng=jnp.ones((1, D1), jnp.float32),
        s1_lnb=jnp.zeros((1, D1), jnp.float32),
        s1_wa=dense(ks[4], D1, F1), s1_ba=bias(ks[5], F1),
        s1_wb=dense(ks[6], F1, D1), s1_bb=bias(ks[7], D1),
        s2_w=dense(ks[8], D1, D2), s2_b=bias(ks[9], D2),
        s2_lng=jnp.ones((1, D2), jnp.float32),
        s2_lnb=jnp.zeros((1, D2), jnp.float32),
        s2_wa=dense(ks[10], D2, F2), s2_ba=bias(ks[11], F2),
        s2_wb=dense(ks[12], F2, D2), s2_bb=bias(ks[13], D2),
        cls_w=dense(ks[14], D2, NCLS), cls_b=bias(ks[15], NCLS),
    )


def siamese_forward(params, input1, input2, *, tb=16):
    """tb: batch elements per grid step. tb*L~128 suits v5e; use tb=32..64 on
    v6e/v7x (keep >=2 grid steps per chip on v7x so both TCs get work)."""
    B, L = input1.shape
    # TODO(synk): CharacterBertModel (pretrained encoder) has no in-script
    # equivalent; stubbed with a deterministic token+position embedding.
    bert_output1 = params['emb'][input1] + params['pos'][None, :L, :]  # (B, L, H)
    # Torch eval forward: bert_output2 = dropout_1(bert_output1), so both towers
    # consume bert_output1 and input2 never reaches the output.
    del input2

    wslab, waslab, vslab = pack_params(params)
    x = bert_output1.astype(jnp.bfloat16)

    # Pad the batch to a multiple of tb (zero rows, dropped after the call) so
    # every grid step is identical and every store is unmasked.
    grid_b = pl.cdiv(B, tb)
    b_pad = grid_b * tb
    if b_pad != B:
        x = jnp.pad(x, ((0, b_pad - B), (0, 0), (0, 0)))

    out = pl.pallas_call(
        _siamese_head_kernel,
        out_shape=jax.ShapeDtypeStruct((b_pad, OUTW), jnp.float32),
        grid_spec=pltpu.PrefetchScalarGridSpec(
            num_scalar_prefetch=0,
            grid=(grid_b,),
            in_specs=[
                pl.BlockSpec((tb, L, H), lambda b: (b, 0, 0)),      # activations
                pl.BlockSpec((WROWS, 128), lambda b: (0, 0)),       # weight slab
                pl.BlockSpec((D1P, F1), lambda b: (0, 0)),          # W_a1 slab
                pl.BlockSpec((VROWS, VCOLS), lambda b: (0, 0)),     # bias/LN slab
            ],
            out_specs=pl.BlockSpec((tb, OUTW), lambda b: (b, 0)),   # lane-dense
        ),
        compiler_params=pltpu.CompilerParams(
            dimension_semantics=("parallel",)),   # v7x: shard batch across TCs
    )(x, wslab, waslab, vslab)
    return out[:B, :NCLS]


def reference_forward(params, input1, input2):
    """Pure-JAX f32 reference mirroring the torch eval-mode forward."""
    B, L = input1.shape
    x = params['emb'][input1] + params['pos'][None, :L, :]

    def scale(z, w, b, g, beta, wa, ba, wb, bb):
        h = jnp.einsum('bld,df->blf', z, w) + b
        mu = jnp.mean(h, -1, keepdims=True)
        var = jnp.mean((h - mu) ** 2, -1, keepdims=True)
        hn = (h - mu) / jnp.sqrt(var + LN_EPS) * g + beta
        inter = jnp.maximum(jnp.einsum('bld,df->blf', hn, wa) + ba, 0.0)
        return jnp.einsum('blf,fd->bld', inter, wb) + bb + h

    p = params
    y = scale(x, p['s1_w'], p['s1_b'], p['s1_lng'], p['s1_lnb'],
              p['s1_wa'], p['s1_ba'], p['s1_wb'], p['s1_bb'])
    y = scale(y, p['s2_w'], p['s2_b'], p['s2_lng'], p['s2_lnb'],
              p['s2_wa'], p['s2_ba'], p['s2_wb'], p['s2_bb'])
    scaled = y + y                                   # both towers identical in eval
    pooled = jnp.sum(scaled[:, 1:, :], axis=1) / L   # divides by L, as in torch
    logits = pooled @ p['cls_w'] + p['cls_b']
    return jax.nn.softmax(logits, axis=1)


if __name__ == "__main__":
    key = jax.random.PRNGKey(0)
    k_params, k_in1, k_in2 = jax.random.split(key, 3)

    B, L, VOCAB = 2, 8, 50
    params = init_params(k_params, vocab=VOCAB, max_len=16)
    input1 = jax.random.randint(k_in1, (B, L), 0, VOCAB, dtype=jnp.int32)
    input2 = jax.random.randint(k_in2, (B, L), 0, VOCAB, dtype=jnp.int32)

    out = jax.jit(siamese_forward)(params, input1, input2)
    out = jax.block_until_ready(out)

    ref = reference_forward(params, input1, input2)

    assert out.shape == (B, NCLS)
    assert bool(jnp.all(jnp.isfinite(out)))
    # rows sum to ~1 (softmax; approx-reciprocal leaves a tiny residual)
    assert bool(jnp.allclose(jnp.sum(out, axis=1), 1.0, atol=2e-3))
    # matches f32 reference (loose tolerance: bf16 MXU operands in the kernel)
    assert bool(jnp.allclose(out, ref, atol=1e-2))
    print("KERNEL_OK")
</pallas_src>

<mosaic_0001>
module attributes {stable_mosaic.version = 11 : i64} {
  func.func @_siamese_head_kernel(%arg0: i32, %arg1: memref<16x8x128xbf16, #tpu.memory_space<vmem>>, %arg2: memref<896x128xbf16, #tpu.memory_space<vmem>>, %arg3: memref<128x256xbf16, #tpu.memory_space<vmem>>, %arg4: memref<16x256xf32, #tpu.memory_space<vmem>>, %arg5: memref<16x128xf32, #tpu.memory_space<vmem>>) attributes {dimension_semantics = [#tpu.dimension_semantics<parallel>], iteration_bounds = array<i64: 1>, scalar_prefetch = 0 : i64, scratch_operands = 0 : i64, tpu.core_type = #tpu.core_type<tc>, window_params = [{transform_indices = @transform_0, window_bounds = array<i64: 16, 8, 128>}, {pipeline_mode = #tpu.pipeline_mode<synchronous>, transform_indices = @transform_1, window_bounds = array<i64: 896, 128>}, {pipeline_mode = #tpu.pipeline_mode<synchronous>, transform_indices = @transform_2, window_bounds = array<i64: 128, 256>}, {pipeline_mode = #tpu.pipeline_mode<synchronous>, transform_indices = @transform_3, window_bounds = array<i64: 16, 256>}, {transform_indices = @transform_4, window_bounds = array<i64: 16, 128>}]} {
    %c0 = arith.constant 0 : index
    %c0_0 = arith.constant 0 : index
    %c0_1 = arith.constant 0 : index
    %0 = vector.load %arg1[%c0, %c0_0, %c0_1] : memref<16x8x128xbf16, #tpu.memory_space<vmem>>, vector<16x8x128xbf16>
    %1 = vector.shape_cast %0 : vector<16x8x128xbf16> to vector<128x128xbf16>
    %c0_2 = arith.constant 0 : index
    %c0_3 = arith.constant 0 : index
    %2 = vector.load %arg2[%c0_2, %c0_3] : memref<896x128xbf16, #tpu.memory_space<vmem>>, vector<128x128xbf16>
    %c0_4 = arith.constant 0 : index
    %c0_5 = arith.constant 0 : index
    %3 = vector.load %arg4[%c0_4, %c0_5] : memref<16x256xf32, #tpu.memory_space<vmem>>, vector<1x128xf32>
    %c1 = arith.constant 1 : index
    %c0_6 = arith.constant 0 : index
    %4 = vector.load %arg4[%c1, %c0_6] : memref<16x256xf32, #tpu.memory_space<vmem>>, vector<1x128xf32>
    %c2 = arith.constant 2 : index
    %c0_7 = arith.constant 0 : index
    %5 = vector.load %arg4[%c2, %c0_7] : memref<16x256xf32, #tpu.memory_space<vmem>>, vector<1x128xf32>
    %c0_8 = arith.constant 0 : index
    %c0_9 = arith.constant 0 : index
    %6 = vector.load %arg3[%c0_8, %c0_9] : memref<128x256xbf16, #tpu.memory_space<vmem>>, vector<128x256xbf16>
    %c3 = arith.constant 3 : index
    %c0_10 = arith.constant 0 : index
    %7 = vector.load %arg4[%c3, %c0_10] : memref<16x256xf32, #tpu.memory_space<vmem>>, vector<1x256xf32>
    %c128 = arith.constant 128 : index
    %c0_11 = arith.constant 0 : index
    %8 = vector.load %arg2[%c128, %c0_11] : memref<896x128xbf16, #tpu.memory_space<vmem>>, vector<256x128xbf16>
    %c4 = arith.constant 4 : index
    %c0_12 = arith.constant 0 : index
    %9 = vector.load %arg4[%c4, %c0_12] : memref<16x256xf32, #tpu.memory_space<vmem>>, vector<1x128xf32>
    %cst = arith.constant dense<0.000000e+00> : vector<128x128xf32>
    %10 = tpu.matmul %1, %2, %cst {dimension_numbers = #tpu.dot_dimension_numbers<[1], [0], [0], [1], [0, 0, 1, 1], [], []>} : vector<128x128xbf16>, vector<128x128xbf16>, vector<128x128xf32> -> vector<128x128xf32>
    %11 = vector.broadcast %3 : vector<1x128xf32> to vector<128x128xf32>
    %12 = arith.addf %10, %11 : vector<128x128xf32>
    %cst_13 = arith.constant dense<0.000000e+00> : vector<128xf32>
    %13 = vector.multi_reduction <add>, %12, %cst_13 [1] : vector<128x128xf32> to vector<128xf32>
    %14 = vector.shape_cast %13 : vector<128xf32> to vector<128x1xf32>
    %cst_14 = arith.constant 1.562500e-02 : f32
    %15 = vector.broadcast %cst_14 : f32 to vector<128x1xf32>
    %16 = arith.mulf %14, %15 : vector<128x1xf32>
    %17 = arith.mulf %12, %12 : vector<128x128xf32>
    %cst_15 = arith.constant dense<0.000000e+00> : vector<128xf32>
    %18 = vector.multi_reduction <add>, %17, %cst_15 [1] : vector<128x128xf32> to vector<128xf32>
    %19 = vector.shape_cast %18 : vector<128xf32> to vector<128x1xf32>
    %cst_16 = arith.constant 1.562500e-02 : f32
    %20 = vector.broadcast %cst_16 : f32 to vector<128x1xf32>
    %21 = arith.mulf %19, %20 : vector<128x1xf32>
    %22 = arith.mulf %16, %16 : vector<128x1xf32>
    %23 = arith.subf %21, %22 : vector<128x1xf32>
    %cst_17 = arith.constant 0.000000e+00 : f32
    %24 = vector.broadcast %cst_17 : f32 to vector<128x1xf32>
    %25 = arith.maximumf %23, %24 : vector<128x1xf32>
    %26 = vector.broadcast %16 : vector<128x1xf32> to vector<128x128xf32>
    %27 = arith.subf %12, %26 : vector<128x128xf32>
    %cst_18 = arith.constant 9.99999974E-6 : f32
    %28 = vector.broadcast %cst_18 : f32 to vector<128x1xf32>
    %29 = arith.addf %25, %28 : vector<128x1xf32>
    %30 = math.rsqrt %29 : vector<128x1xf32>
    %31 = vector.broadcast %30 : vector<128x1xf32> to vector<128x128xf32>
    %32 = arith.mulf %27, %31 : vector<128x128xf32>
    %33 = vector.broadcast %4 : vector<1x128xf32> to vector<128x128xf32>
    %34 = arith.mulf %32, %33 : vector<128x128xf32>
    %35 = vector.broadcast %5 : vector<1x128xf32> to vector<128x128xf32>
    %36 = arith.addf %34, %35 : vector<128x128xf32>
    %37 = arith.truncf %36 : vector<128x128xf32> to vector<128x128xbf16>
    %cst_19 = arith.constant dense<0.000000e+00> : vector<128x256xf32>
    %38 = tpu.matmul %37, %6, %cst_19 {dimension_numbers = #tpu.dot_dimension_numbers<[1], [0], [0], [1], [0, 0, 1, 1], [], []>} : vector<128x128xbf16>, vector<128x256xbf16>, vector<128x256xf32> -> vector<128x256xf32>
    %39 = vector.broadcast %7 : vector<1x256xf32> to vector<128x256xf32>
    %40 = arith.addf %38, %39 : vector<128x256xf32>
    %cst_20 = arith.constant 0.000000e+00 : f32
    %41 = vector.broadcast %cst_20 : f32 to vector<128x256xf32>
    %42 = arith.maximumf %40, %41 : vector<128x256xf32>
    %43 = arith.truncf %42 : vector<128x256xf32> to vector<128x256xbf16>
    %cst_21 = arith.constant dense<0.000000e+00> : vector<128x128xf32>
    %44 = tpu.matmul %43, %8, %cst_21 {dimension_numbers = #tpu.dot_dimension_numbers<[1], [0], [0], [1], [0, 0, 1, 1], [], []>} : vector<128x256xbf16>, vector<256x128xbf16>, vector<128x128xf32> -> vector<128x128xf32>
    %45 = vector.broadcast %9 : vector<1x128xf32> to vector<128x128xf32>
    %46 = arith.addf %44, %45 : vector<128x128xf32>
    %47 = arith.addf %46, %12 : vector<128x128xf32>
    %48 = arith.truncf %47 : vector<128x128xf32> to vector<128x128xbf16>
    %c384 = arith.constant 384 : index
    %c0_22 = arith.constant 0 : index
    %49 = vector.load %arg2[%c384, %c0_22] : memref<896x128xbf16, #tpu.memory_space<vmem>>, vector<128x128xbf16>
    %c5 = arith.constant 5 : index
    %c0_23 = arith.constant 0 : index
    %50 = vector.load %arg4[%c5, %c0_23] : memref<16x256xf32, #tpu.memory_space<vmem>>, vector<1x128xf32>
    %c6 = arith.constant 6 : index
    %c0_24 = arith.constant 0 : index
    %51 = vector.load %arg4[%c6, %c0_24] : memref<16x256xf32, #tpu.memory_space<vmem>>, vector<1x128xf32>
    %c7 = arith.constant 7 : index
    %c0_25 = arith.constant 0 : index
    %52 = vector.load %arg4[%c7, %c0_25] : memref<16x256xf32, #tpu.memory_space<vmem>>, vector<1x128xf32>
    %c512 = arith.constant 512 : index
    %c0_26 = arith.constant 0 : index
    %53 = vector.load %arg2[%c512, %c0_26] : memref<896x128xbf16, #tpu.memory_space<vmem>>, vector<128x128xbf16>
    %c8 = arith.constant 8 : index
    %c0_27 = arith.constant 0 : index
    %54 = vector.load %arg4[%c8, %c0_27] : memref<16x256xf32, #tpu.memory_space<vmem>>, vector<1x128xf32>
    %c640 = arith.constant 640 : index
    %c0_28 = arith.constant 0 : index
    %55 = vector.load %arg2[%c640, %c0_28] : memref<896x128xbf16, #tpu.memory_space<vmem>>, vector<128x128xbf16>
    %c9 = arith.constant 9 : index
    %c0_29 = arith.constant 0 : index
    %56 = vector.load %arg4[%c9, %c0_29] : memref<16x256xf32, #tpu.memory_space<vmem>>, vector<1x128xf32>
    %cst_30 = arith.constant dense<0.000000e+00> : vector<128x128xf32>
    %57 = tpu.matmul %48, %49, %cst_30 {dimension_numbers = #tpu.dot_dimension_numbers<[1], [0], [0], [1], [0, 0, 1, 1], [], []>} : vector<128x128xbf16>, vector<128x128xbf16>, vector<128x128xf32> -> vector<128x128xf32>
    %58 = vector.broadcast %50 : vector<1x128xf32> to vector<128x128xf32>
    %59 = arith.addf %57, %58 : vector<128x128xf32>
    %cst_31 = arith.constant dense<0.000000e+00> : vector<128xf32>
    %60 = vector.multi_reduction <add>, %59, %cst_31 [1] : vector<128x128xf32> to vector<128xf32>
    %61 = vector.shape_cast %60 : vector<128xf32> to vector<128x1xf32>
    %cst_32 = arith.constant 3.125000e-02 : f32
    %62 = vector.broadcast %cst_32 : f32 to vector<128x1xf32>
    %63 = arith.mulf %61, %62 : vector<128x1xf32>
    %64 = arith.mulf %59, %59 : vector<128x128xf32>
    %cst_33 = arith.constant dense<0.000000e+00> : vector<128xf32>
    %65 = vector.multi_reduction <add>, %64, %cst_33 [1] : vector<128x128xf32> to vector<128xf32>
    %66 = vector.shape_cast %65 : vector<128xf32> to vector<128x1xf32>
    %cst_34 = arith.constant 3.125000e-02 : f32
    %67 = vector.broadcast %cst_34 : f32 to vector<128x1xf32>
    %68 = arith.mulf %66, %67 : vector<128x1xf32>
    %69 = arith.mulf %63, %63 : vector<128x1xf32>
    %70 = arith.subf %68, %69 : vector<128x1xf32>
    %cst_35 = arith.constant 0.000000e+00 : f32
    %71 = vector.broadcast %cst_35 : f32 to vector<128x1xf32>
    %72 = arith.maximumf %70, %71 : vector<128x1xf32>
    %73 = vector.broadcast %63 : vector<128x1xf32> to vector<128x128xf32>
    %74 = arith.subf %59, %73 : vector<128x128xf32>
    %cst_36 = arith.constant 9.99999974E-6 : f32
    %75 = vector.broadcast %cst_36 : f32 to vector<128x1xf32>
    %76 = arith.addf %72, %75 : vector<128x1xf32>
    %77 = math.rsqrt %76 : vector<128x1xf32>
    %78 = vector.broadcast %77 : vector<128x1xf32> to vector<128x128xf32>
    %79 = arith.mulf %74, %78 : vector<128x128xf32>
    %80 = vector.broadcast %51 : vector<1x128xf32> to vector<128x128xf32>
    %81 = arith.mulf %79, %80 : vector<128x128xf32>
    %82 = vector.broadcast %52 : vector<1x128xf32> to vector<128x128xf32>
    %83 = arith.addf %81, %82 : vector<128x128xf32>
    %84 = arith.truncf %83 : vector<128x128xf32> to vector<128x128xbf16>
    %cst_37 = arith.constant dense<0.000000e+00> : vector<128x128xf32>
    %85 = tpu.matmul %84, %53, %cst_37 {dimension_numbers = #tpu.dot_dimension_numbers<[1], [0], [0], [1], [0, 0, 1, 1], [], []>} : vector<128x128xbf16>, vector<128x128xbf16>, vector<128x128xf32> -> vector<128x128xf32>
    %86 = vector.broadcast %54 : vector<1x128xf32> to vector<128x128xf32>
    %87 = arith.addf %85, %86 : vector<128x128xf32>
    %cst_38 = arith.constant 0.000000e+00 : f32
    %88 = vector.broadcast %cst_38 : f32 to vector<128x128xf32>
    %89 = arith.maximumf %87, %88 : vector<128x128xf32>
    %90 = arith.truncf %89 : vector<128x128xf32> to vector<128x128xbf16>
    %cst_39 = arith.constant dense<0.000000e+00> : vector<128x128xf32>
    %91 = tpu.matmul %90, %55, %cst_39 {dimension_numbers = #tpu.dot_dimension_numbers<[1], [0], [0], [1], [0, 0, 1, 1], [], []>} : vector<128x128xbf16>, vector<128x128xbf16>, vector<128x128xf32> -> vector<128x128xf32>
    %92 = vector.broadcast %56 : vector<1x128xf32> to vector<128x128xf32>
    %93 = arith.addf %91, %92 : vector<128x128xf32>
    %94 = arith.addf %93, %59 : vector<128x128xf32>
    %95 = vector.shape_cast %94 : vector<128x128xf32> to vector<16x8x128xf32>
    %96 = tpu.iota {dimensions = array<i32: 1>} : vector<16x8x128xi32>
    %c0_i32 = arith.constant 0 : i32
    %97 = vector.broadcast %c0_i32 : i32 to vector<16x8x128xi32>
    %98 = arith.cmpi sgt, %96, %97 : vector<16x8x128xi32>
    %cst_40 = arith.constant 0.000000e+00 : f32
    %99 = vector.broadcast %cst_40 : f32 to vector<16x8x128xf32>
    %100 = arith.select %98, %95, %99 : vector<16x8x128xi1>, vector<16x8x128xf32>
    %cst_41 = arith.constant dense<0.000000e+00> : vector<16x128xf32>
    %101 = vector.multi_reduction <add>, %100, %cst_41 [1] : vector<16x8x128xf32> to vector<16x128xf32>
    %cst_42 = arith.constant 2.500000e-01 : f32
    %102 = vector.broadcast %cst_42 : f32 to vector<16x128xf32>
    %103 = arith.mulf %101, %102 : vector<16x128xf32>
    %104 = arith.truncf %103 : vector<16x128xf32> to vector<16x128xbf16>
    %c768 = arith.constant 768 : index
    %c0_43 = arith.constant 0 : index
    %105 = vector.load %arg2[%c768, %c0_43] : memref<896x128xbf16, #tpu.memory_space<vmem>>, vector<128x128xbf16>
    %cst_44 = arith.constant dense<0.000000e+00> : vector<16x128xf32>
    %106 = tpu.matmul %104, %105, %cst_44 {dimension_numbers = #tpu.dot_dimension_numbers<[1], [0], [0], [1], [0, 0, 1, 1], [], []>} : vector<16x128xbf16>, vector<128x128xbf16>, vector<16x128xf32> -> vector<16x128xf32>
    %c10 = arith.constant 10 : index
    %c0_45 = arith.constant 0 : index
    %107 = vector.load %arg4[%c10, %c0_45] : memref<16x256xf32, #tpu.memory_space<vmem>>, vector<1x128xf32>
    %108 = vector.broadcast %107 : vector<1x128xf32> to vector<16x128xf32>
    %109 = arith.addf %106, %108 : vector<16x128xf32>
    %110 = tpu.iota {dimensions = array<i32: 1>} : vector<16x128xi32>
    %c2_i32 = arith.constant 2 : i32
    %111 = vector.broadcast %c2_i32 : i32 to vector<16x128xi32>
    %112 = arith.cmpi slt, %110, %111 : vector<16x128xi32>
    %cst_46 = arith.constant -1.000000e+30 : f32
    %113 = vector.broadcast %cst_46 : f32 to vector<16x128xf32>
    %114 = arith.select %112, %109, %113 : vector<16x128xi1>, vector<16x128xf32>
    %cst_47 = arith.constant dense<0xFF800000> : vector<16xf32>
    %115 = vector.multi_reduction <maximumf>, %114, %cst_47 [1] : vector<16x128xf32> to vector<16xf32>
    %116 = vector.shape_cast %115 : vector<16xf32> to vector<16x1xf32>
    %117 = vector.broadcast %116 : vector<16x1xf32> to vector<16x128xf32>
    %118 = arith.subf %114, %117 : vector<16x128xf32>
    %119 = math.exp %118 : vector<16x128xf32>
    %cst_48 = arith.constant dense<0.000000e+00> : vector<16xf32>
    %120 = vector.multi_reduction <add>, %119, %cst_48 [1] : vector<16x128xf32> to vector<16xf32>
    %121 = vector.shape_cast %120 : vector<16xf32> to vector<16x1xf32>
    %122 = tpu.reciprocal %121 {approx = true} : vector<16x1xf32> -> vector<16x1xf32>
    %123 = vector.broadcast %122 : vector<16x1xf32> to vector<16x128xf32>
    %124 = arith.mulf %119, %123 : vector<16x128xf32>
    %c0_49 = arith.constant 0 : index
    %c0_50 = arith.constant 0 : index
    %125 = vector.load %arg5[%c0_49, %c0_50] : memref<16x128xf32, #tpu.memory_space<vmem>>, vector<16x128xf32>
    tpu.vector_store %arg5[%c0_49, %c0_50], %124 {strides = array<i32>} : memref<16x128xf32, #tpu.memory_space<vmem>>, vector<16x128xf32>,
    return
  }
  func.func @transform_0(%arg0: i32) -> (i32, i32, i32) {
    %c0_i32 = arith.constant 0 : i32
    %c0_i32_0 = arith.constant 0 : i32
    %c0_i32_1 = arith.constant 0 : i32
    return %arg0, %c0_i32, %c0_i32_0 : i32, i32, i32
  }
  func.func @transform_1(%arg0: i32) -> (i32, i32) {
    %c0_i32 = arith.constant 0 : i32
    %c0_i32_0 = arith.constant 0 : i32
    %c0_i32_1 = arith.constant 0 : i32
    return %c0_i32, %c0_i32_0 : i32, i32
  }
  func.func @transform_2(%arg0: i32) -> (i32, i32) {
    %c0_i32 = arith.constant 0 : i32
    %c0_i32_0 = arith.constant 0 : i32
    %c0_i32_1 = arith.constant 0 : i32
    return %c0_i32, %c0_i32_0 : i32, i32
  }
  func.func @transform_3(%arg0: i32) -> (i32, i32) {
    %c0_i32 = arith.constant 0 : i32
    %c0_i32_0 = arith.constant 0 : i32
    %c0_i32_1 = arith.constant 0 : i32
    return %c0_i32, %c0_i32_0 : i32, i32
  }
  func.func @transform_4(%arg0: i32) -> (i32, i32) {
    %c0_i32 = arith.constant 0 : i32
    %c0_i32_0 = arith.constant 0 : i32
    return %arg0, %c0_i32 : i32, i32
  }
}

</mosaic_0001>

<llo_original>
// kernel: siamese_forward.1
$region0: #{siamese_forward.1}
  #allocation0 [shape = 'u32[]', space=smem, size = 0x4, offset = 0x4, fixed_abs, tag = 'smem constant byte address 0x4 - core index']
  #allocation1 [shape = 'u32[144,128]{1,0:T(1,128)}', space=vmem, size = 0x12000, scoped, tag = 'internal scratch']
  %s0 = inlined_call_operand.vmem [shape: bf16[16,8,128], index: 0, kind: input, shape index: {}]
  %s1 = inlined_call_operand.vmem [shape: bf16[896,128], index: 1, kind: input, shape index: {}]
  %s2 = inlined_call_operand.vmem [shape: bf16[128,256], index: 2, kind: input, shape index: {}]
  %s3 = inlined_call_operand.vmem [shape: f32[16,256], index: 3, kind: input, shape index: {}]
  %s4 = inlined_call_operand.vmem [shape: f32[16,128], index: 4, kind: output, shape index: {}]
  %s5 = sld [smem:[#allocation0]]
  $region26: #{siamese_forward.1} parent=0
    _
  %s7 = ssub.s32 1, %s5
  %s8 = scalar_select 0, %s7, %s5
  // Predicated region
  $region2: #{siamese_forward.1} parent=0 // pred_check
    _
  $region3: #{siamese_forward.1} parent=0 // pred_check_branch
    %10 = sbr.rel (0) target = $region5
  $region4: #{siamese_forward.1} parent=0 // pred_region
    _
  $region5: #{siamese_forward.1} parent=0 // pred_fallthru
    _
  // Predicated region
  $region6: #{siamese_forward.1} parent=0 // pred_check
    _
  $region7: #{siamese_forward.1} parent=0 // pred_check_branch
    %12 = sbr.rel (0) target = $region9
  $region8: #{siamese_forward.1} parent=0 // pred_region
    _
  $region9: #{siamese_forward.1} parent=0 // pred_fallthru
    _
  // Predicated region
  $region10: #{siamese_forward.1} parent=0 // pred_check
    _
  $region11: #{siamese_forward.1} parent=0 // pred_check_branch
    %14 = sbr.rel (0) target = $region13
  $region12: #{siamese_forward.1} parent=0 // pred_region
    _
  $region13: #{siamese_forward.1} parent=0 // pred_fallthru
    _
  // Predicated region
  $region14: #{siamese_forward.1} parent=0 // pred_check
    _
  $region15: #{siamese_forward.1} parent=0 // pred_check_branch
    %16 = sbr.rel (0) target = $region17
  $region16: #{siamese_forward.1} parent=0 // pred_region
    _
  $region17: #{siamese_forward.1} parent=0 // pred_fallthru
    _
  %v18 = vld [vmem:[%s0] sm:$0xf]
  %v19 = vld [vmem:[%s0 + $0x4] sm:$0xf]
  %v20 = vld [vmem:[%s0 + $0x8] sm:$0xf]
  %v21 = vld [vmem:[%s0 + $0xc] sm:$0xf]
  %v22 = vld [vmem:[%s0 + $0x10] sm:$0xf]
  %v23 = vld [vmem:[%s0 + $0x14] sm:$0xf]
  %v24 = vld [vmem:[%s0 + $0x18] sm:$0xf]
  %v25 = vld [vmem:[%s0 + $0x1c] sm:$0xf]
  %v26 = vld [vmem:[%s0 + $0x20] sm:$0xf]
  %v27 = vld [vmem:[%s0 + $0x24] sm:$0xf]
  %v28 = vld [vmem:[%s0 + $0x28] sm:$0xf]
  %v29 = vld [vmem:[%s0 + $0x2c] sm:$0xf]
  %v30 = vld [vmem:[%s0 + $0x30] sm:$0xf]
  %v31 = vld [vmem:[%s0 + $0x34] sm:$0xf]
  %v32 = vld [vmem:[%s0 + $0x38] sm:$0xf]
  %v33 = vld [vmem:[%s0 + $0x3c] sm:$0xf]
  %v34 = vld [vmem:[%s1] sm:$0xf]
  %v35 = vld [vmem:[%s1 + $0x4] sm:$0xf]
  %v36 = vld [vmem:[%s1 + $0x8] sm:$0xf]
  %v37 = vld [vmem:[%s1 + $0xc] sm:$0xf]
  %v38 = vld [vmem:[%s1 + $0x10] sm:$0xf]
  %v39 = vld [vmem:[%s1 + $0x14] sm:$0xf]
  %v40 = vld [vmem:[%s1 + $0x18] sm:$0xf]
  %v41 = vld [vmem:[%s1 + $0x1c] sm:$0xf]
  %v42 = vld [vmem:[%s1 + $0x20] sm:$0xf]
  %v43 = vld [vmem:[%s1 + $0x24] sm:$0xf]
  %v44 = vld [vmem:[%s1 + $0x28] sm:$0xf]
  %v45 = vld [vmem:[%s1 + $0x2c] sm:$0xf]
  %v46 = vld [vmem:[%s1 + $0x30] sm:$0xf]
  %v47 = vld [vmem:[%s1 + $0x34] sm:$0xf]
  %v48 = vld [vmem:[%s1 + $0x38] sm:$0xf]
  %v49 = vld [vmem:[%s1 + $0x3c] sm:$0xf]
  %v50 = vld [vmem:[%s3] ss:$0 sm:$0xff]
  %v51 = vld [vmem:[%s3 + $0x1] ss:$0 sm:$0xff]
  %v52 = vld [vmem:[%s3 + $0x2] ss:$0 sm:$0xff]
  %v53 = vld [vmem:[%s2] sm:$0xff]
  %v54 = vld [vmem:[%s2 + $0x8] sm:$0xff]
  %v55 = vld [vmem:[%s2 + $0x10] sm:$0xff]
  %v56 = vld [vmem:[%s2 + $0x18] sm:$0xff]
  %v57 = vld [vmem:[%s2 + $0x20] sm:$0xff]
  %v58 = vld [vmem:[%s2 + $0x28] sm:$0xff]
  %v59 = vld [vmem:[%s2 + $0x30] sm:$0xff]
  %v60 = vld [vmem:[%s2 + $0x38] sm:$0xff]
  %v61 = vld [vmem:[%s2 + $0x40] sm:$0xff]
  %v62 = vld [vmem:[%s2 + $0x48] sm:$0xff]
  %v63 = vld [vmem:[%s2 + $0x50] sm:$0xff]
  %v64 = vld [vmem:[%s2 + $0x58] sm:$0xff]
  %v65 = vld [vmem:[%s2 + $0x60] sm:$0xff]
  %v66 = vld [vmem:[%s2 + $0x68] sm:$0xff]
  %v67 = vld [vmem:[%s2 + $0x70] sm:$0xff]
  %v68 = vld [vmem:[%s2 + $0x78] sm:$0xff]
  %s69 = scalar_lea.vmem %s3, 3
  %v70 = vld [vmem:[%s69] ss:$8 sm:$0x3]
  %v71 = vld [vmem:[%s1 + $0x40] sm:$0xf]
  %v72 = vld [vmem:[%s1 + $0x44] sm:$0xf]
  %v73 = vld [vmem:[%s1 + $0x48] sm:$0xf]
  %v74 = vld [vmem:[%s1 + $0x4c] sm:$0xf]
  %v75 = vld [vmem:[%s1 + $0x50] sm:$0xf]
  %v76 = vld [vmem:[%s1 + $0x54] sm:$0xf]
  %v77 = vld [vmem:[%s1 + $0x58] sm:$0xf]
  %v78 = vld [vmem:[%s1 + $0x5c] sm:$0xf]
  %v79 = vld [vmem:[%s1 + $0x60] sm:$0xf]
  %v80 = vld [vmem:[%s1 + $0x64] sm:$0xf]
  %v81 = vld [vmem:[%s1 + $0x68] sm:$0xf]
  %v82 = vld [vmem:[%s1 + $0x6c] sm:$0xf]
  %v83 = vld [vmem:[%s1 + $0x70] sm:$0xf]
  %v84 = vld [vmem:[%s1 + $0x74] sm:$0xf]
  %v85 = vld [vmem:[%s1 + $0x78] sm:$0xf]
  %v86 = vld [vmem:[%s1 + $0x7c] sm:$0xf]
  %v87 = vld [vmem:[%s1 + $0x80] sm:$0xf]
  %v88 = vld [vmem:[%s1 + $0x84] sm:$0xf]
  %v89 = vld [vmem:[%s1 + $0x88] sm:$0xf]
  %v90 = vld [vmem:[%s1 + $0x8c] sm:$0xf]
  %v91 = vld [vmem:[%s1 + $0x90] sm:$0xf]
  %v92 = vld [vmem:[%s1 + $0x94] sm:$0xf]
  %v93 = vld [vmem:[%s1 + $0x98] sm:$0xf]
  %v94 = vld [vmem:[%s1 + $0x9c] sm:$0xf]
  %v95 = vld [vmem:[%s1 + $0xa0] sm:$0xf]
  %v96 = vld [vmem:[%s1 + $0xa4] sm:$0xf]
  %v97 = vld [vmem:[%s1 + $0xa8] sm:$0xf]
  %v98 = vld [vmem:[%s1 + $0xac] sm:$0xf]
  %v99 = vld [vmem:[%s1 + $0xb0] sm:$0xf]
  %v100 = vld [vmem:[%s1 + $0xb4] sm:$0xf]
  %v101 = vld [vmem:[%s1 + $0xb8] sm:$0xf]
  %v102 = vld [vmem:[%s1 + $0xbc] sm:$0xf]
  %v103 = vld [vmem:[%s3 + $0x4] ss:$0 sm:$0xff]
  %v120 = vunpack.c.l.b16 %v18
  %v121 = vunpack.c.l.b16 %v19
  %v122 = vunpack.c.l.b16 %v20
  %v123 = vunpack.c.l.b16 %v21
  %v124 = vunpack.c.l.b16 %v22
  %v125 = vunpack.c.l.b16 %v23
  %v126 = vunpack.c.l.b16 %v24
  %v127 = vunpack.c.l.b16 %v25
  %v128 = vunpack.c.l.b16 %v26
  %v129 = vunpack.c.l.b16 %v27
  %v130 = vunpack.c.l.b16 %v28
  %v131 = vunpack.c.l.b16 %v29
  %v132 = vunpack.c.l.b16 %v30
  %v133 = vunpack.c.l.b16 %v31
  %v134 = vunpack.c.l.b16 %v32
  %v135 = vunpack.c.l.b16 %v33
  %v136 = vpack.c.b16 %v121, %v120
  %v137 = vpack.c.b16 %v123, %v122
  %v138 = vpack.c.b16 %v125, %v124
  %v139 = vpack.c.b16 %v127, %v126
  %v140 = vpack.c.b16 %v129, %v128
  %v141 = vpack.c.b16 %v131, %v130
  %v142 = vpack.c.b16 %v133, %v132
  %v143 = vpack.c.b16 %v135, %v134
  %v168 = vunpack.c.l.b16 %v34
  %v169 = vunpack.c.l.b16 %v35
  %v170 = vunpack.c.l.b16 %v36
  %v171 = vunpack.c.l.b16 %v37
  %v172 = vunpack.c.l.b16 %v38
  %v173 = vunpack.c.l.b16 %v39
  %v174 = vunpack.c.l.b16 %v40
  %v175 = vunpack.c.l.b16 %v41
  %v176 = vunpack.c.l.b16 %v42
  %v177 = vunpack.c.l.b16 %v43
  %v178 = vunpack.c.l.b16 %v44
  %v179 = vunpack.c.l.b16 %v45
  %v180 = vunpack.c.l.b16 %v46
  %v181 = vunpack.c.l.b16 %v47
  %v182 = vunpack.c.l.b16 %v48
  %v183 = vunpack.c.l.b16 %v49
  %v184 = vpack.c.b16 %v169, %v168
  %v185 = vpack.c.b16 %v171, %v170
  %v186 = vpack.c.b16 %v173, %v172
  %v187 = vpack.c.b16 %v175, %v174
  %v188 = vpack.c.b16 %v177, %v176
  %v189 = vpack.c.b16 %v179, %v178
  %v190 = vpack.c.b16 %v181, %v180
  %v191 = vpack.c.b16 %v183, %v182
  %200 = vmatprep.subr.bf16.mxu0 0
  %201 = vmatpush1.bf16.msra.mxu0 %v184
  %202 = vmatprep.subr.bf16.mxu0 0
  %203 = vmatpush1.bf16.msra.mxu0 %v185
  %204 = vmatprep.subr.bf16.mxu0 0
  %205 = vmatpush1.bf16.msra.mxu0 %v186
  %206 = vmatprep.subr.bf16.mxu0 0
  %207 = vmatpush1.bf16.msra.mxu0 %v187
  %208 = vmatprep.subr.bf16.mxu0 0
  %209 = vmatpush1.bf16.msra.mxu0 %v188
  %210 = vmatprep.subr.bf16.mxu0 0
  %211 = vmatpush1.bf16.msra.mxu0 %v189
  %212 = vmatprep.subr.bf16.mxu0 0
  %213 = vmatpush1.bf16.msra.mxu0 %v190
  %214 = vmatprep.subr.bf16.mxu0 0
  %215 = vmatpush1.bf16.msra.mxu0 %v191
  %216 = vmatprep.subr.bf16.mxu0 0
  %217 = vmatpush1.bf16.msra.mxu0 0
  %218 = vmatprep.subr.bf16.mxu0 0
  %219 = vmatpush1.bf16.msra.mxu0 0
  %220 = vmatprep.subr.bf16.mxu0 0
  %221 = vmatpush1.bf16.msra.mxu0 0
  %222 = vmatprep.subr.bf16.mxu0 0
  %223 = vmatpush1.bf16.msra.mxu0 0
  %224 = vmatprep.subr.bf16.mxu0 0
  %225 = vmatpush1.bf16.msra.mxu0 0
  %226 = vmatprep.subr.bf16.mxu0 0
  %227 = vmatpush1.bf16.msra.mxu0 0
  %228 = vmatprep.subr.bf16.mxu0 0
  %229 = vmatpush1.bf16.msra.mxu0 0
  %230 = vmatprep.subr.bf16.mxu0 0
  %231 = vmatpush1.bf16.msra.mxu0 0
  %232 = vmatprep.mubr.bf16.mxu0 0
  %233 = vmatmul.mubr.bf16.gmra.mrb[0].mxu0 %v136
  %v234 = vpop.f32.mrb[0].mxu0
  %v235 = vadd.f32 %v50, %v234
  %v236 = vpop.f32.mrb[0].mxu0
  %v237 = vpop.f32.mrb[0].mxu0
  %v238 = vadd.f32 %v50, %v237
  %v239 = vpop.f32.mrb[0].mxu0
  %240 = vmatprep.mubr.bf16.mxu0 0
  %241 = vmatmul.mubr.bf16.gmra.mrb[0].mxu0 %v137
  %v242 = vpop.f32.mrb[0].mxu0
  %v243 = vadd.f32 %v50, %v242
  %v244 = vpop.f32.mrb[0].mxu0
  %v245 = vpop.f32.mrb[0].mxu0
  %v246 = vadd.f32 %v50, %v245
  %v247 = vpop.f32.mrb[0].mxu0
  %248 = vmatprep.mubr.bf16.mxu0 0
  %249 = vmatmul.mubr.bf16.gmra.mrb[0].mxu0 %v138
  %v250 = vpop.f32.mrb[0].mxu0
  %v251 = vadd.f32 %v50, %v250
  %v252 = vpop.f32.mrb[0].mxu0
  %v253 = vpop.f32.mrb[0].mxu0
  %v254 = vadd.f32 %v50, %v253
  %v255 = vpop.f32.mrb[0].mxu0
  %256 = vmatprep.mubr.bf16.mxu0 0
  %257 = vmatmul.mubr.bf16.gmra.mrb[0].mxu0 %v139
  %v258 = vpop.f32.mrb[0].mxu0
  %v259 = vadd.f32 %v50, %v258
  %v260 = vpop.f32.mrb[0].mxu0
  %v261 = vpop.f32.mrb[0].mxu0
  %v262 = vadd.f32 %v50, %v261
  %v263 = vpop.f32.mrb[0].mxu0
  %264 = vmatprep.mubr.bf16.mxu0 0
  %265 = vmatmul.mubr.bf16.gmra.mrb[0].mxu0 %v140
  %v266 = vpop.f32.mrb[0].mxu0
  %v267 = vadd.f32 %v50, %v266
  %v268 = vpop.f32.mrb[0].mxu0
  %v269 = vpop.f32.mrb[0].mxu0
  %v270 = vadd.f32 %v50, %v269
  %v271 = vpop.f32.mrb[0].mxu0
  %272 = vmatprep.mubr.bf16.mxu0 0
  %273 = vmatmul.mubr.bf16.gmra.mrb[0].mxu0 %v141
  %v274 = vpop.f32.mrb[0].mxu0
  %v275 = vadd.f32 %v50, %v274
  %v276 = vpop.f32.mrb[0].mxu0
  %v277 = vpop.f32.mrb[0].mxu0
  %v278 = vadd.f32 %v50, %v277
  %v279 = vpop.f32.mrb[0].mxu0
  %280 = vmatprep.mubr.bf16.mxu0 0
  %281 = vmatmul.mubr.bf16.gmra.mrb[0].mxu0 %v142
  %v282 = vpop.f32.mrb[0].mxu0
  %v283 = vadd.f32 %v50, %v282
  %v284 = vpop.f32.mrb[0].mxu0
  %v285 = vpop.f32.mrb[0].mxu0
  %v286 = vadd.f32 %v50, %v285
  %v287 = vpop.f32.mrb[0].mxu0
  %288 = vmatprep.mubr.bf16.mxu0 0
  %289 = vmatmul.mubr.bf16.gmra.mrb[0].mxu0 %v143
  %v290 = vpop.f32.mrb[0].mxu0
  %v291 = vadd.f32 %v50, %v290
  %v292 = vpop.f32.mrb[0].mxu0
  %v293 = vpop.f32.mrb[0].mxu0
  %v294 = vadd.f32 %v50, %v293
  %v295 = vpop.f32.mrb[0].mxu0
  %296 = vdwg.mxu0
  %297 = vadd.xlane.f32.xlu0 %v235
  %v298 = vpop.xlane.xlu0 %297
  %299 = vadd.xlane.f32.xlu0 %v238
  %v300 = vpop.xlane.xlu0 %299
  %301 = vadd.xlane.f32.xlu0 %v243
  %v302 = vpop.xlane.xlu0 %301
  %303 = vadd.xlane.f32.xlu0 %v246
  %v304 = vpop.xlane.xlu0 %303
  %305 = vadd.xlane.f32.xlu0 %v251
  %v306 = vpop.xlane.xlu0 %305
  %307 = vadd.xlane.f32.xlu0 %v254
  %v308 = vpop.xlane.xlu0 %307
  %309 = vadd.xlane.f32.xlu0 %v259
  %v310 = vpop.xlane.xlu0 %309
  %311 = vadd.xlane.f32.xlu0 %v262
  %v312 = vpop.xlane.xlu0 %311
  %313 = vadd.xlane.f32.xlu0 %v267
  %v314 = vpop.xlane.xlu0 %313
  %315 = vadd.xlane.f32.xlu0 %v270
  %v316 = vpop.xlane.xlu0 %315
  %317 = vadd.xlane.f32.xlu0 %v275
  %v318 = vpop.xlane.xlu0 %317
  %319 = vadd.xlane.f32.xlu0 %v278
  %v320 = vpop.xlane.xlu0 %319
  %321 = vadd.xlane.f32.xlu0 %v283
  %v322 = vpop.xlane.xlu0 %321
  %323 = vadd.xlane.f32.xlu0 %v286
  %v324 = vpop.xlane.xlu0 %323
  %325 = vadd.xlane.f32.xlu0 %v291
  %v326 = vpop.xlane.xlu0 %325
  %327 = vadd.xlane.f32.xlu0 %v294
  %v328 = vpop.xlane.xlu0 %327
  %v329 = vmul.f32 %v298, 0.015625
  %v330 = vmul.f32 %v300, 0.015625
  %v331 = vmul.f32 %v302, 0.015625
  %v332 = vmul.f32 %v304, 0.015625
  %v333 = vmul.f32 %v306, 0.015625
  %v334 = vmul.f32 %v308, 0.015625
  %v335 = vmul.f32 %v310, 0.015625
  %v336 = vmul.f32 %v312, 0.015625
  %v337 = vmul.f32 %v314, 0.015625
  %v338 = vmul.f32 %v316, 0.015625
  %v339 = vmul.f32 %v318, 0.015625
  %v340 = vmul.f32 %v320, 0.015625
  %v341 = vmul.f32 %v322, 0.015625
  %v342 = vmul.f32 %v324, 0.015625
  %v343 = vmul.f32 %v326, 0.015625
  %v344 = vmul.f32 %v328, 0.015625
  %v345 = vmul.f32 %v235, %v235
  %v346 = vmul.f32 %v238, %v238
  %v347 = vmul.f32 %v243, %v243
  %v348 = vmul.f32 %v246, %v246
  %v349 = vmul.f32 %v251, %v251
  %v350 = vmul.f32 %v254, %v254
  %v351 = vmul.f32 %v259, %v259
  %v352 = vmul.f32 %v262, %v262
  %v353 = vmul.f32 %v267, %v267
  %v354 = vmul.f32 %v270, %v270
  %v355 = vmul.f32 %v275, %v275
  %v356 = vmul.f32 %v278, %v278
  %v357 = vmul.f32 %v283, %v283
  %v358 = vmul.f32 %v286, %v286
  %v359 = vmul.f32 %v291, %v291
  %v360 = vmul.f32 %v294, %v294
  %361 = vadd.xlane.f32.xlu0 %v345
  %v362 = vpop.xlane.xlu0 %361
  %363 = vadd.xlane.f32.xlu0 %v346
  %v364 = vpop.xlane.xlu0 %363
  %365 = vadd.xlane.f32.xlu0 %v347
  %v366 = vpop.xlane.xlu0 %365
  %367 = vadd.xlane.f32.xlu0 %v348
  %v368 = vpop.xlane.xlu0 %367
  %369 = vadd.xlane.f32.xlu0 %v349
  %v370 = vpop.xlane.xlu0 %369
  %371 = vadd.xlane.f32.xlu0 %v350
  %v372 = vpop.xlane.xlu0 %371
  %373 = vadd.xlane.f32.xlu0 %v351
  %v374 = vpop.xlane.xlu0 %373
  %375 = vadd.xlane.f32.xlu0 %v352
  %v376 = vpop.xlane.xlu0 %375
  %377 = vadd.xlane.f32.xlu0 %v353
  %v378 = vpop.xlane.xlu0 %377
  %379 = vadd.xlane.f32.xlu0 %v354
  %v380 = vpop.xlane.xlu0 %379
  %381 = vadd.xlane.f32.xlu0 %v355
  %v382 = vpop.xlane.xlu0 %381
  %383 = vadd.xlane.f32.xlu0 %v356
  %v384 = vpop.xlane.xlu0 %383
  %385 = vadd.xlane.f32.xlu0 %v357
  %v386 = vpop.xlane.xlu0 %385
  %387 = vadd.xlane.f32.xlu0 %v358
  %v388 = vpop.xlane.xlu0 %387
  %389 = vadd.xlane.f32.xlu0 %v359
  %v390 = vpop.xlane.xlu0 %389
  %391 = vadd.xlane.f32.xlu0 %v360
  %v392 = vpop.xlane.xlu0 %391
  %v393 = vmul.f32 %v362, 0.015625
  %v394 = vmul.f32 %v364, 0.015625
  %v395 = vmul.f32 %v366, 0.015625
  %v396 = vmul.f32 %v368, 0.015625
  %v397 = vmul.f32 %v370, 0.015625
  %v398 = vmul.f32 %v372, 0.015625
  %v399 = vmul.f32 %v374, 0.015625
  %v400 = vmul.f32 %v376, 0.015625
  %v401 = vmul.f32 %v378, 0.015625
  %v402 = vmul.f32 %v380, 0.015625
  %v403 = vmul.f32 %v382, 0.015625
  %v404 = vmul.f32 %v384, 0.015625
  %v405 = vmul.f32 %v386, 0.015625
  %v406 = vmul.f32 %v388, 0.015625
  %v407 = vmul.f32 %v390, 0.015625
  %v408 = vmul.f32 %v392, 0.015625
  %v409 = vmul.f32 %v329, %v329
  %v410 = vmul.f32 %v330, %v330
  %v411 = vmul.f32 %v331, %v331
  %v412 = vmul.f32 %v332, %v332
  %v413 = vmul.f32 %v333, %v333
  %v414 = vmul.f32 %v334, %v334
  %v415 = vmul.f32 %v335, %v335
  %v416 = vmul.f32 %v336, %v336
  %v417 = vmul.f32 %v337, %v337
  %v418 = vmul.f32 %v338, %v338
  %v419 = vmul.f32 %v339, %v339
  %v420 = vmul.f32 %v340, %v340
  %v421 = vmul.f32 %v341, %v341
  %v422 = vmul.f32 %v342, %v342
  %v423 = vmul.f32 %v343, %v343
  %v424 = vmul.f32 %v344, %v344
  %v425 = vsub.f32 %v393, %v409
  %v426 = vsub.f32 %v394, %v410
  %v427 = vsub.f32 %v395, %v411
  %v428 = vsub.f32 %v396, %v412
  %v429 = vsub.f32 %v397, %v413
  %v430 = vsub.f32 %v398, %v414
  %v431 = vsub.f32 %v399, %v415
  %v432 = vsub.f32 %v400, %v416
  %v433 = vsub.f32 %v401, %v417
  %v434 = vsub.f32 %v402, %v418
  %v435 = vsub.f32 %v403, %v419
  %v436 = vsub.f32 %v404, %v420
  %v437 = vsub.f32 %v405, %v421
  %v438 = vsub.f32 %v406, %v422
  %v439 = vsub.f32 %v407, %v423
  %v440 = vsub.f32 %v408, %v424
  %v441 = vmax.f32 %v425, 0.0
  %v442 = vmax.f32 %v426, 0.0
  %v443 = vmax.f32 %v427, 0.0
  %v444 = vmax.f32 %v428, 0.0
  %v445 = vmax.f32 %v429, 0.0
  %v446 = vmax.f32 %v430, 0.0
  %v447 = vmax.f32 %v431, 0.0
  %v448 = vmax.f32 %v432, 0.0
  %v449 = vmax.f32 %v433, 0.0
  %v450 = vmax.f32 %v434, 0.0
  %v451 = vmax.f32 %v435, 0.0
  %v452 = vmax.f32 %v436, 0.0
  %v453 = vmax.f32 %v437, 0.0
  %v454 = vmax.f32 %v438, 0.0
  %v455 = vmax.f32 %v439, 0.0
  %v456 = vmax.f32 %v440, 0.0
  %v457 = vsub.f32 %v235, %v329
  %v458 = vsub.f32 %v238, %v330
  %v459 = vsub.f32 %v243, %v331
  %v460 = vsub.f32 %v246, %v332
  %v461 = vsub.f32 %v251, %v333
  %v462 = vsub.f32 %v254, %v334
  %v463 = vsub.f32 %v259, %v335
  %v464 = vsub.f32 %v262, %v336
  %v465 = vsub.f32 %v267, %v337
  %v466 = vsub.f32 %v270, %v338
  %v467 = vsub.f32 %v275, %v339
  %v468 = vsub.f32 %v278, %v340
  %v469 = vsub.f32 %v283, %v341
  %v470 = vsub.f32 %v286, %v342
  %v471 = vsub.f32 %v291, %v343
  %v472 = vsub.f32 %v294, %v344
  %v473 = vadd.f32 %v441, 1e-05
  %v474 = vadd.f32 %v442, 1e-05
  %v475 = vadd.f32 %v443, 1e-05
  %v476 = vadd.f32 %v444, 1e-05
  %v477 = vadd.f32 %v445, 1e-05
  %v478 = vadd.f32 %v446, 1e-05
  %v479 = vadd.f32 %v447, 1e-05
  %v480 = vadd.f32 %v448, 1e-05
  %v481 = vadd.f32 %v449, 1e-05
  %v482 = vadd.f32 %v450, 1e-05
  %v483 = vadd.f32 %v451, 1e-05
  %v484 = vadd.f32 %v452, 1e-05
  %v485 = vadd.f32 %v453, 1e-05
  %v486 = vadd.f32 %v454, 1e-05
  %v487 = vadd.f32 %v455, 1e-05
  %v488 = vadd.f32 %v456, 1e-05
  %v489 = vrsqrt.pop %v473
  %v490 = vrsqrt.pop %v474
  %v491 = vrsqrt.pop %v475
  %v492 = vrsqrt.pop %v476
  %v493 = vrsqrt.pop %v477
  %v494 = vrsqrt.pop %v478
  %v495 = vrsqrt.pop %v479
  %v496 = vrsqrt.pop %v480
  %v497 = vrsqrt.pop %v481
  %v498 = vrsqrt.pop %v482
  %v499 = vrsqrt.pop %v483
  %v500 = vrsqrt.pop %v484
  %v501 = vrsqrt.pop %v485
  %v502 = vrsqrt.pop %v486
  %v503 = vrsqrt.pop %v487
  %v504 = vrsqrt.pop %v488
  %v505 = vmul.f32 %v457, %v489
  %v506 = vmul.f32 %v458, %v490
  %v507 = vmul.f32 %v459, %v491
  %v508 = vmul.f32 %v460, %v492
  %v509 = vmul.f32 %v461, %v493
  %v510 = vmul.f32 %v462, %v494
  %v511 = vmul.f32 %v463, %v495
  %v512 = vmul.f32 %v464, %v496
  %v513 = vmul.f32 %v465, %v497
  %v514 = vmul.f32 %v466, %v498
  %v515 = vmul.f32 %v467, %v499
  %v516 = vmul.f32 %v468, %v500
  %v517 = vmul.f32 %v469, %v501
  %v518 = vmul.f32 %v470, %v502
  %v519 = vmul.f32 %v471, %v503
  %v520 = vmul.f32 %v472, %v504
  %v521 = vmul.f32 %v505, %v51
  %v522 = vmul.f32 %v506, %v51
  %v523 = vmul.f32 %v507, %v51
  %v524 = vmul.f32 %v508, %v51
  %v525 = vmul.f32 %v509, %v51
  %v526 = vmul.f32 %v510, %v51
  %v527 = vmul.f32 %v511, %v51
  %v528 = vmul.f32 %v512, %v51
  %v529 = vmul.f32 %v513, %v51
  %v530 = vmul.f32 %v514, %v51
  %v531 = vmul.f32 %v515, %v51
  %v532 = vmul.f32 %v516, %v51
  %v533 = vmul.f32 %v517, %v51
  %v534 = vmul.f32 %v518, %v51
  %v535 = vmul.f32 %v519, %v51
  %v536 = vmul.f32 %v520, %v51
  %v537 = vadd.f32 %v521, %v52
  %v538 = vadd.f32 %v522, %v52
  %v539 = vadd.f32 %v523, %v52
  %v540 = vadd.f32 %v524, %v52
  %v541 = vadd.f32 %v525, %v52
  %v542 = vadd.f32 %v526, %v52
  %v543 = vadd.f32 %v527, %v52
  %v544 = vadd.f32 %v528, %v52
  %v545 = vadd.f32 %v529, %v52
  %v546 = vadd.f32 %v530, %v52
  %v547 = vadd.f32 %v531, %v52
  %v548 = vadd.f32 %v532, %v52
  %v549 = vadd.f32 %v533, %v52
  %v550 = vadd.f32 %v534, %v52
  %v551 = vadd.f32 %v535, %v52
  %v552 = vadd.f32 %v536, %v52
  %v553 = vpack.c.bf16 %v538, %v537
  %v554 = vpack.c.bf16 %v540, %v539
  %v555 = vpack.c.bf16 %v542, %v541
  %v556 = vpack.c.bf16 %v544, %v543
  %v557 = vpack.c.bf16 %v546, %v545
  %v558 = vpack.c.bf16 %v548, %v547
  %v559 = vpack.c.bf16 %v550, %v549
  %v560 = vpack.c.bf16 %v552, %v551
  %v562 = vlaneseq
  %v563 = vshrl.u32 %v562, 7
  %v564 = vsub.s32 0, %v563
  %v565 = vrot.slane %v70, %v564
  %v566 = vlaneseq
  %v567 = vshrl.u32 %v566, 7
  %v568 = vsub.s32 1, %v567
  %v569 = vrot.slane %v70, %v568
  %v588 = vunpack.c.l.b16 %v53
  %v589 = vunpack.c.h.b16 %v53
  %v590 = vunpack.c.l.b16 %v54
  %v591 = vunpack.c.h.b16 %v54
  %v592 = vunpack.c.l.b16 %v55
  %v593 = vunpack.c.h.b16 %v55
  %v594 = vunpack.c.l.b16 %v56
  %v595 = vunpack.c.h.b16 %v56
  %v596 = vunpack.c.l.b16 %v57
  %v597 = vunpack.c.h.b16 %v57
  %v598 = vunpack.c.l.b16 %v58
  %v599 = vunpack.c.h.b16 %v58
  %v600 = vunpack.c.l.b16 %v59
  %v601 = vunpack.c.h.b16 %v59
  %v602 = vunpack.c.l.b16 %v60
  %v603 = vunpack.c.h.b16 %v60
  %v604 = vunpack.c.l.b16 %v61
  %v605 = vunpack.c.h.b16 %v61
  %v606 = vunpack.c.l.b16 %v62
  %v607 = vunpack.c.h.b16 %v62
  %v608 = vunpack.c.l.b16 %v63
  %v609 = vunpack.c.h.b16 %v63
  %v610 = vunpack.c.l.b16 %v64
  %v611 = vunpack.c.h.b16 %v64
  %v612 = vunpack.c.l.b16 %v65
  %v613 = vunpack.c.h.b16 %v65
  %v614 = vunpack.c.l.b16 %v66
  %v615 = vunpack.c.h.b16 %v66
  %v616 = vunpack.c.l.b16 %v67
  %v617 = vunpack.c.h.b16 %v67
  %v618 = vunpack.c.l.b16 %v68
  %v619 = vunpack.c.h.b16 %v68
  %v620 = vpack.c.b16 %v590, %v588
  %v621 = vpack.c.b16 %v591, %v589
  %v622 = vpack.c.b16 %v594, %v592
  %v623 = vpack.c.b16 %v595, %v593
  %v624 = vpack.c.b16 %v598, %v596
  %v625 = vpack.c.b16 %v599, %v597
  %v626 = vpack.c.b16 %v602, %v600
  %v627 = vpack.c.b16 %v603, %v601
  %v628 = vpack.c.b16 %v606, %v604
  %v629 = vpack.c.b16 %v607, %v605
  %v630 = vpack.c.b16 %v610, %v608
  %v631 = vpack.c.b16 %v611, %v609
  %v632 = vpack.c.b16 %v614, %v612
  %v633 = vpack.c.b16 %v615, %v613
  %v634 = vpack.c.b16 %v618, %v616
  %v635 = vpack.c.b16 %v619, %v617
  %652 = vmatprep.subr.bf16.mxu0 %v621
  %653 = vmatpush1.bf16.msra.mxu0 %v620
  %654 = vmatprep.subr.bf16.mxu0 %v623
  %655 = vmatpush1.bf16.msra.mxu0 %v622
  %656 = vmatprep.subr.bf16.mxu0 %v625
  %657 = vmatpush1.bf16.msra.mxu0 %v624
  %658 = vmatprep.subr.bf16.mxu0 %v627
  %659 = vmatpush1.bf16.msra.mxu0 %v626
  %660 = vmatprep.subr.bf16.mxu0 %v629
  %661 = vmatpush1.bf16.msra.mxu0 %v628
  %662 = vmatprep.subr.bf16.mxu0 %v631
  %663 = vmatpush1.bf16.msra.mxu0 %v630
  %664 = vmatprep.subr.bf16.mxu0 %v633
  %665 = vmatpush1.bf16.msra.mxu0 %v632
  %666 = vmatprep.subr.bf16.mxu0 %v635
  %667 = vmatpush1.bf16.msra.mxu0 %v634
  %668 = vmatprep.subr.bf16.mxu0 0
  %669 = vmatpush1.bf16.msra.mxu0 0
  %670 = vmatprep.subr.bf16.mxu0 0
  %671 = vmatpush1.bf16.msra.mxu0 0
  %672 = vmatprep.subr.bf16.mxu0 0
  %673 = vmatpush1.bf16.msra.mxu0 0
  %674 = vmatprep.subr.bf16.mxu0 0
  %675 = vmatpush1.bf16.msra.mxu0 0
  %676 = vmatprep.subr.bf16.mxu0 0
  %677 = vmatpush1.bf16.msra.mxu0 0
  %678 = vmatprep.subr.bf16.mxu0 0
  %679 = vmatpush1.bf16.msra.mxu0 0
  %680 = vmatprep.subr.bf16.mxu0 0
  %681 = vmatpush1.bf16.msra.mxu0 0
  %682 = vmatprep.subr.bf16.mxu0 0
  %683 = vmatpush1.bf16.msra.mxu0 0
  %684 = vmatprep.mubr.bf16.mxu0 0
  %685 = vmatmul.mubr.bf16.gmra.mrb[0].mxu0 %v553
  %v686 = vpop.f32.mrb[0].mxu0
  %v687 = vadd.f32 %v565, %v686
  %v688 = vpop.f32.mrb[0].mxu0
  %v689 = vadd.f32 %v569, %v688
  %v690 = vpop.f32.mrb[0].mxu0
  %v691 = vadd.f32 %v565, %v690
  %v692 = vpop.f32.mrb[0].mxu0
  %v693 = vadd.f32 %v569, %v692
  %694 = vmatprep.mubr.bf16.mxu0 0
  %695 = vmatmul.mubr.bf16.gmra.mrb[0].mxu0 %v554
  %v696 = vpop.f32.mrb[0].mxu0
  %v697 = vadd.f32 %v565, %v696
  %v698 = vpop.f32.mrb[0].mxu0
  %v699 = vadd.f32 %v569, %v698
  %v700 = vpop.f32.mrb[0].mxu0
  %v701 = vadd.f32 %v565, %v700
  %v702 = vpop.f32.mrb[0].mxu0
  %v703 = vadd.f32 %v569, %v702
  %704 = vmatprep.mubr.bf16.mxu0 0
  %705 = vmatmul.mubr.bf16.gmra.mrb[0].mxu0 %v555
  %v706 = vpop.f32.mrb[0].mxu0
  %v707 = vadd.f32 %v565, %v706
  %v708 = vpop.f32.mrb[0].mxu0
  %v709 = vadd.f32 %v569, %v708
  %v710 = vpop.f32.mrb[0].mxu0
  %v711 = vadd.f32 %v565, %v710
  %v712 = vpop.f32.mrb[0].mxu0
  %v713 = vadd.f32 %v569, %v712
  %714 = vmatprep.mubr.bf16.mxu0 0
  %715 = vmatmul.mubr.bf16.gmra.mrb[0].mxu0 %v556
  %v716 = vpop.f32.mrb[0].mxu0
  %v717 = vadd.f32 %v565, %v716
  %v718 = vpop.f32.mrb[0].mxu0
  %v719 = vadd.f32 %v569, %v718
  %v720 = vpop.f32.mrb[0].mxu0
  %v721 = vadd.f32 %v565, %v720
  %v722 = vpop.f32.mrb[0].mxu0
  %v723 = vadd.f32 %v569, %v722
  %724 = vmatprep.mubr.bf16.mxu0 0
  %725 = vmatmul.mubr.bf16.gmra.mrb[0].mxu0 %v557
  %v726 = vpop.f32.mrb[0].mxu0
  %v727 = vadd.f32 %v565, %v726
  %v728 = vpop.f32.mrb[0].mxu0
  %v729 = vadd.f32 %v569, %v728
  %v730 = vpop.f32.mrb[0].mxu0
  %v731 = vadd.f32 %v565, %v730
  %v732 = vpop.f32.mrb[0].mxu0
  %v733 = vadd.f32 %v569, %v732
  %734 = vmatprep.mubr.bf16.mxu0 0
  %735 = vmatmul.mubr.bf16.gmra.mrb[0].mxu0 %v558
  %v736 = vpop.f32.mrb[0].mxu0
  %v737 = vadd.f32 %v565, %v736
  %v738 = vpop.f32.mrb[0].mxu0
  %v739 = vadd.f32 %v569, %v738
  %v740 = vpop.f32.mrb[0].mxu0
  %v741 = vadd.f32 %v565, %v740
  %v742 = vpop.f32.mrb[0].mxu0
  %v743 = vadd.f32 %v569, %v742
  %744 = vmatprep.mubr.bf16.mxu0 0
  %745 = vmatmul.mubr.bf16.gmra.mrb[0].mxu0 %v559
  %v746 = vpop.f32.mrb[0].mxu0
  %v747 = vadd.f32 %v565, %v746
  %v748 = vpop.f32.mrb[0].mxu0
  %v749 = vadd.f32 %v569, %v748
  %v750 = vpop.f32.mrb[0].mxu0
  %v751 = vadd.f32 %v565, %v750
  %v752 = vpop.f32.mrb[0].mxu0
  %v753 = vadd.f32 %v569, %v752
  %754 = vmatprep.mubr.bf16.mxu0 0
  %755 = vmatmul.mubr.bf16.gmra.mrb[0].mxu0 %v560
  %v756 = vpop.f32.mrb[0].mxu0
  %v757 = vadd.f32 %v565, %v756
  %v758 = vpop.f32.mrb[0].mxu0
  %v759 = vadd.f32 %v569, %v758
  %v760 = vpop.f32.mrb[0].mxu0
  %v761 = vadd.f32 %v565, %v760
  %v762 = vpop.f32.mrb[0].mxu0
  %v763 = vadd.f32 %v569, %v762
  %764 = vdwg.mxu0
  %v765 = vmax.f32 %v687, 0.0
  %v766 = vmax.f32 %v689, 0.0
  %v767 = vmax.f32 %v691, 0.0
  %v768 = vmax.f32 %v693, 0.0
  %v769 = vmax.f32 %v697, 0.0
  %v770 = vmax.f32 %v699, 0.0
  %v771 = vmax.f32 %v701, 0.0
  %v772 = vmax.f32 %v703, 0.0
  %v773 = vmax.f32 %v707, 0.0
  %v774 = vmax.f32 %v709, 0.0
  %v775 = vmax.f32 %v711, 0.0
  %v776 = vmax.f32 %v713, 0.0
  %v777 = vmax.f32 %v717, 0.0
  %v778 = vmax.f32 %v719, 0.0
  %v779 = vmax.f32 %v721, 0.0
  %v780 = vmax.f32 %v723, 0.0
  %v781 = vmax.f32 %v727, 0.0
  %v782 = vmax.f32 %v729, 0.0
  %v783 = vmax.f32 %v731, 0.0
  %v784 = vmax.f32 %v733, 0.0
  %v785 = vmax.f32 %v737, 0.0
  %v786 = vmax.f32 %v739, 0.0
  %v787 = vmax.f32 %v741, 0.0
  %v788 = vmax.f32 %v743, 0.0
  %v789 = vmax.f32 %v747, 0.0
  %v790 = vmax.f32 %v749, 0.0
  %v791 = vmax.f32 %v751, 0.0
  %v792 = vmax.f32 %v753, 0.0
  %v793 = vmax.f32 %v757, 0.0
  %v794 = vmax.f32 %v759, 0.0
  %v795 = vmax.f32 %v761, 0.0
  %v796 = vmax.f32 %v763, 0.0
  %v797 = vpack.c.bf16 %v767, %v765
  %v798 = vpack.c.bf16 %v768, %v766
  %v799 = vpack.c.bf16 %v771, %v769
  %v800 = vpack.c.bf16 %v772, %v770
  %v801 = vpack.c.bf16 %v775, %v773
  %v802 = vpack.c.bf16 %v776, %v774
  %v803 = vpack.c.bf16 %v779, %v777
  %v804 = vpack.c.bf16 %v780, %v778
  %v805 = vpack.c.bf16 %v783, %v781
  %v806 = vpack.c.bf16 %v784, %v782
  %v807 = vpack.c.bf16 %v787, %v785
  %v808 = vpack.c.bf16 %v788, %v786
  %v809 = vpack.c.bf16 %v791, %v789
  %v810 = vpack.c.bf16 %v792, %v790
  %v811 = vpack.c.bf16 %v795, %v793
  %v812 = vpack.c.bf16 %v796, %v794
  %v845 = vunpack.c.l.b16 %v71
  %v846 = vunpack.c.l.b16 %v72
  %v847 = vunpack.c.l.b16 %v73
  %v848 = vunpack.c.l.b16 %v74
  %v849 = vunpack.c.l.b16 %v75
  %v850 = vunpack.c.l.b16 %v76
  %v851 = vunpack.c.l.b16 %v77
  %v852 = vunpack.c.l.b16 %v78
  %v853 = vunpack.c.l.b16 %v79
  %v854 = vunpack.c.l.b16 %v80
  %v855 = vunpack.c.l.b16 %v81
  %v856 = vunpack.c.l.b16 %v82
  %v857 = vunpack.c.l.b16 %v83
  %v858 = vunpack.c.l.b16 %v84
  %v859 = vunpack.c.l.b16 %v85
  %v860 = vunpack.c.l.b16 %v86
  %v861 = vunpack.c.l.b16 %v87
  %v862 = vunpack.c.l.b16 %v88
  %v863 = vunpack.c.l.b16 %v89
  %v864 = vunpack.c.l.b16 %v90
  %v865 = vunpack.c.l.b16 %v91
  %v866 = vunpack.c.l.b16 %v92
  %v867 = vunpack.c.l.b16 %v93
  %v868 = vunpack.c.l.b16 %v94
  %v869 = vunpack.c.l.b16 %v95
  %v870 = vunpack.c.l.b16 %v96
  %v871 = vunpack.c.l.b16 %v97
  %v872 = vunpack.c.l.b16 %v98
  %v873 = vunpack.c.l.b16 %v99
  %v874 = vunpack.c.l.b16 %v100
  %v875 = vunpack.c.l.b16 %v101
  %v876 = vunpack.c.l.b16 %v102
  %v877 = vpack.c.b16 %v846, %v845
  %v878 = vpack.c.b16 %v848, %v847
  %v879 = vpack.c.b16 %v850, %v849
  %v880 = vpack.c.b16 %v852, %v851
  %v881 = vpack.c.b16 %v854, %v853
  %v882 = vpack.c.b16 %v856, %v855
  %v883 = vpack.c.b16 %v858, %v857
  %v884 = vpack.c.b16 %v860, %v859
  %v885 = vpack.c.b16 %v862, %v861
  %v886 = vpack.c.b16 %v864, %v863
  %v887 = vpack.c.b16 %v866, %v865
  %v888 = vpack.c.b16 %v868, %v867
  %v889 = vpack.c.b16 %v870, %v869
  %v890 = vpack.c.b16 %v872, %v871
  %v891 = vpack.c.b16 %v874, %v873
  %v892 = vpack.c.b16 %v876, %v875
  %909 = vmatprep.subr.bf16.mxu0 0
  %910 = vmatpush1.bf16.msra.mxu0 %v877
  %911 = vmatprep.subr.bf16.mxu0 0
  %912 = vmatpush1.bf16.msra.mxu0 %v878
  %913 = vmatprep.subr.bf16.mxu0 0
  %914 = vmatpush1.bf16.msra.mxu0 %v879
  %915 = vmatprep.subr.bf16.mxu0 0
  %916 = vmatpush1.bf16.msra.mxu0 %v880
  %917 = vmatprep.subr.bf16.mxu0 0
  %918 = vmatpush1.bf16.msra.mxu0 %v881
  %919 = vmatprep.subr.bf16.mxu0 0
  %920 = vmatpush1.bf16.msra.mxu0 %v882
  %921 = vmatprep.subr.bf16.mxu0 0
  %922 = vmatpush1.bf16.msra.mxu0 %v883
  %923 = vmatprep.subr.bf16.mxu0 0
  %924 = vmatpush1.bf16.msra.mxu0 %v884
  %925 = vmatprep.subr.bf16.mxu0 0
  %926 = vmatpush1.bf16.msra.mxu0 %v885
  %927 = vmatprep.subr.bf16.mxu0 0
  %928 = vmatpush1.bf16.msra.mxu0 %v886
  %929 = vmatprep.subr.bf16.mxu0 0
  %930 = vmatpush1.bf16.msra.mxu0 %v887
  %931 = vmatprep.subr.bf16.mxu0 0
  %932 = vmatpush1.bf16.msra.mxu0 %v888
  %933 = vmatprep.subr.bf16.mxu0 0
  %934 = vmatpush1.bf16.msra.mxu0 %v889
  %935 = vmatprep.subr.bf16.mxu0 0
  %936 = vmatpush1.bf16.msra.mxu0 %v890
  %937 = vmatprep.subr.bf16.mxu0 0
  %938 = vmatpush1.bf16.msra.mxu0 %v891
  %939 = vmatprep.subr.bf16.mxu0 0
  %940 = vmatpush1.bf16.msra.mxu0 %v892
  %941 = vmatprep.mubr.bf16.mxu0 %v798
  %942 = vmatmul.mubr.bf16.gmra.mrb[0].mxu0 %v797
  %v943 = vpop.f32.mrb[0].mxu0
  %v944 = vadd.f32 %v103, %v943
  %v945 = vpop.f32.mrb[0].mxu0
  %v946 = vpop.f32.mrb[0].mxu0
  %v947 = vadd.f32 %v103, %v946
  %v948 = vpop.f32.mrb[0].mxu0
  %949 = vmatprep.mubr.bf16.mxu0 %v800
  %950 = vmatmul.mubr.bf16.gmra.mrb[0].mxu0 %v799
  %v951 = vpop.f32.mrb[0].mxu0
  %v952 = vadd.f32 %v103, %v951
  %v953 = vpop.f32.mrb[0].mxu0
  %v954 = vpop.f32.mrb[0].mxu0
  %v955 = vadd.f32 %v103, %v954
  %v956 = vpop.f32.mrb[0].mxu0
  %957 = vmatprep.mubr.bf16.mxu0 %v802
  %958 = vmatmul.mubr.bf16.gmra.mrb[0].mxu0 %v801
  %v959 = vpop.f32.mrb[0].mxu0
  %v960 = vadd.f32 %v103, %v959
  %v961 = vpop.f32.mrb[0].mxu0
  %v962 = vpop.f32.mrb[0].mxu0
  %v963 = vadd.f32 %v103, %v962
  %v964 = vpop.f32.mrb[0].mxu0
  %965 = vmatprep.mubr.bf16.mxu0 %v804
  %966 = vmatmul.mubr.bf16.gmra.mrb[0].mxu0 %v803
  %v967 = vpop.f32.mrb[0].mxu0
  %v968 = vadd.f32 %v103, %v967
  %v969 = vpop.f32.mrb[0].mxu0
  %v970 = vpop.f32.mrb[0].mxu0
  %v971 = vadd.f32 %v103, %v970
  %v972 = vpop.f32.mrb[0].mxu0
  %973 = vmatprep.mubr.bf16.mxu0 %v806
  %974 = vmatmul.mubr.bf16.gmra.mrb[0].mxu0 %v805
  %v975 = vpop.f32.mrb[0].mxu0
  %v976 = vadd.f32 %v103, %v975
  %v977 = vpop.f32.mrb[0].mxu0
  %v978 = vpop.f32.mrb[0].mxu0
  %v979 = vadd.f32 %v103, %v978
  %v980 = vpop.f32.mrb[0].mxu0
  %981 = vmatprep.mubr.bf16.mxu0 %v808
  %982 = vmatmul.mubr.bf16.gmra.mrb[0].mxu0 %v807
  %v983 = vpop.f32.mrb[0].mxu0
  %v984 = vadd.f32 %v103, %v983
  %v985 = vpop.f32.mrb[0].mxu0
  %v986 = vpop.f32.mrb[0].mxu0
  %v987 = vadd.f32 %v103, %v986
  %v988 = vpop.f32.mrb[0].mxu0
  %989 = vmatprep.mubr.bf16.mxu0 %v810
  %990 = vmatmul.mubr.bf16.gmra.mrb[0].mxu0 %v809
  %v991 = vpop.f32.mrb[0].mxu0
  %v992 = vadd.f32 %v103, %v991
  %v993 = vpop.f32.mrb[0].mxu0
  %v994 = vpop.f32.mrb[0].mxu0
  %v995 = vadd.f32 %v103, %v994
  %v996 = vpop.f32.mrb[0].mxu0
  %997 = vmatprep.mubr.bf16.mxu0 %v812
  %998 = vmatmul.mubr.bf16.gmra.mrb[0].mxu0 %v811
  %v999 = vpop.f32.mrb[0].mxu0
  %v1000 = vadd.f32 %v103, %v999
  %v1001 = vpop.f32.mrb[0].mxu0
  %v1002 = vpop.f32.mrb[0].mxu0
  %v1003 = vadd.f32 %v103, %v1002
  %v1004 = vpop.f32.mrb[0].mxu0
  %1005 = vdwg.mxu0
  %v1006 = vadd.f32 %v944, %v235
  %v1007 = vadd.f32 %v947, %v238
  %v1008 = vadd.f32 %v952, %v243
  %v1009 = vadd.f32 %v955, %v246
  %v1010 = vadd.f32 %v960, %v251
  %v1011 = vadd.f32 %v963, %v254
  %v1012 = vadd.f32 %v968, %v259
  %v1013 = vadd.f32 %v971, %v262
  %v1014 = vadd.f32 %v976, %v267
  %v1015 = vadd.f32 %v979, %v270
  %v1016 = vadd.f32 %v984, %v275
  %v1017 = vadd.f32 %v987, %v278
  %v1018 = vadd.f32 %v992, %v283
  %v1019 = vadd.f32 %v995, %v286
  %v1020 = vadd.f32 %v1000, %v291
  %v1021 = vadd.f32 %v1003, %v294
  %v1022 = vpack.c.bf16 %v1007, %v1006
  %v1023 = vpack.c.bf16 %v1009, %v1008
  %v1024 = vpack.c.bf16 %v1011, %v1010
  %v1025 = vpack.c.bf16 %v1013, %v1012
  %v1026 = vpack.c.bf16 %v1015, %v1014
  %v1027 = vpack.c.bf16 %v1017, %v1016
  %v1028 = vpack.c.bf16 %v1019, %v1018
  %v1029 = vpack.c.bf16 %v1021, %v1020
  %v1030 = vld [vmem:[%s1 + $0xc0] sm:$0xf]
  %v1031 = vld [vmem:[%s1 + $0xc4] sm:$0xf]
  %v1032 = vld [vmem:[%s1 + $0xc8] sm:$0xf]
  %v1033 = vld [vmem:[%s1 + $0xcc] sm:$0xf]
  %v1034 = vld [vmem:[%s1 + $0xd0] sm:$0xf]
  %v1035 = vld [vmem:[%s1 + $0xd4] sm:$0xf]
  %v1036 = vld [vmem:[%s1 + $0xd8] sm:$0xf]
  %v1037 = vld [vmem:[%s1 + $0xdc] sm:$0xf]
  %v1038 = vld [vmem:[%s1 + $0xe0] sm:$0xf]
  %v1039 = vld [vmem:[%s1 + $0xe4] sm:$0xf]
  %v1040 = vld [vmem:[%s1 + $0xe8] sm:$0xf]
  %v1041 = vld [vmem:[%s1 + $0xec] sm:$0xf]
  %v1042 = vld [vmem:[%s1 + $0xf0] sm:$0xf]
  %v1043 = vld [vmem:[%s1 + $0xf4] sm:$0xf]
  %v1044 = vld [vmem:[%s1 + $0xf8] sm:$0xf]
  %v1045 = vld [vmem:[%s1 + $0xfc] sm:$0xf]
  %v1046 = vld [vmem:[%s3 + $0x5] ss:$0 sm:$0xff]
  %v1047 = vld [vmem:[%s3 + $0x6] ss:$0 sm:$0xff]
  %v1048 = vld [vmem:[%s3 + $0x7] ss:$0 sm:$0xff]
  %v1049 = vld [vmem:[%s1 + $0x100] sm:$0xf]
  %v1050 = vld [vmem:[%s1 + $0x104] sm:$0xf]
  %v1051 = vld [vmem:[%s1 + $0x108] sm:$0xf]
  %v1052 = vld [vmem:[%s1 + $0x10c] sm:$0xf]
  %v1053 = vld [vmem:[%s1 + $0x110] sm:$0xf]
  %v1054 = vld [vmem:[%s1 + $0x114] sm:$0xf]
  %v1055 = vld [vmem:[%s1 + $0x118] sm:$0xf]
  %v1056 = vld [vmem:[%s1 + $0x11c] sm:$0xf]
  %v1057 = vld [vmem:[%s1 + $0x120] sm:$0xf]
  %v1058 = vld [vmem:[%s1 + $0x124] sm:$0xf]
  %v1059 = vld [vmem:[%s1 + $0x128] sm:$0xf]
  %v1060 = vld [vmem:[%s1 + $0x12c] sm:$0xf]
  %v1061 = vld [vmem:[%s1 + $0x130] sm:$0xf]
  %v1062 = vld [vmem:[%s1 + $0x134] sm:$0xf]
  %v1063 = vld [vmem:[%s1 + $0x138] sm:$0xf]
  %v1064 = vld [vmem:[%s1 + $0x13c] sm:$0xf]
  %v1065 = vld [vmem:[%s3 + $0x10] ss:$0 sm:$0xff]
  %v1066 = vld [vmem:[%s1 + $0x140] sm:$0xf]
  %v1067 = vld [vmem:[%s1 + $0x144] sm:$0xf]
  %v1068 = vld [vmem:[%s1 + $0x148] sm:$0xf]
  %v1069 = vld [vmem:[%s1 + $0x14c] sm:$0xf]
  %v1070 = vld [vmem:[%s1 + $0x150] sm:$0xf]
  %v1071 = vld [vmem:[%s1 + $0x154] sm:$0xf]
  %v1072 = vld [vmem:[%s1 + $0x158] sm:$0xf]
  %v1073 = vld [vmem:[%s1 + $0x15c] sm:$0xf]
  %v1074 = vld [vmem:[%s1 + $0x160] sm:$0xf]
  %v1075 = vld [vmem:[%s1 + $0x164] sm:$0xf]
  %v1076 = vld [vmem:[%s1 + $0x168] sm:$0xf]
  %v1077 = vld [vmem:[%s1 + $0x16c] sm:$0xf]
  %v1078 = vld [vmem:[%s1 + $0x170] sm:$0xf]
  %v1079 = vld [vmem:[%s1 + $0x174] sm:$0xf]
  %v1080 = vld [vmem:[%s1 + $0x178] sm:$0xf]
  %v1081 = vld [vmem:[%s1 + $0x17c] sm:$0xf]
  %v1082 = vld [vmem:[%s3 + $0x11] ss:$0 sm:$0xff]
  %v1099 = vunpack.c.l.b16 %v1030
  %v1100 = vunpack.c.l.b16 %v1031
  %v1101 = vunpack.c.l.b16 %v1032
  %v1102 = vunpack.c.l.b16 %v1033
  %v1103 = vunpack.c.l.b16 %v1034
  %v1104 = vunpack.c.l.b16 %v1035
  %v1105 = vunpack.c.l.b16 %v1036
  %v1106 = vunpack.c.l.b16 %v1037
  %v1107 = vunpack.c.l.b16 %v1038
  %v1108 = vunpack.c.l.b16 %v1039
  %v1109 = vunpack.c.l.b16 %v1040
  %v1110 = vunpack.c.l.b16 %v1041
  %v1111 = vunpack.c.l.b16 %v1042
  %v1112 = vunpack.c.l.b16 %v1043
  %v1113 = vunpack.c.l.b16 %v1044
  %v1114 = vunpack.c.l.b16 %v1045
  %v1115 = vpack.c.b16 %v1100, %v1099
  %v1116 = vpack.c.b16 %v1102, %v1101
  %v1117 = vpack.c.b16 %v1104, %v1103
  %v1118 = vpack.c.b16 %v1106, %v1105
  %v1119 = vpack.c.b16 %v1108, %v1107
  %v1120 = vpack.c.b16 %v1110, %v1109
  %v1121 = vpack.c.b16 %v1112, %v1111
  %v1122 = vpack.c.b16 %v1114, %v1113
  %1131 = vmatprep.subr.bf16.mxu0 0
  %1132 = vmatpush1.bf16.msra.mxu0 %v1115
  %1133 = vmatprep.subr.bf16.mxu0 0
  %1134 = vmatpush1.bf16.msra.mxu0 %v1116
  %1135 = vmatprep.subr.bf16.mxu0 0
  %1136 = vmatpush1.bf16.msra.mxu0 %v1117
  %1137 = vmatprep.subr.bf16.mxu0 0
  %1138 = vmatpush1.bf16.msra.mxu0 %v1118
  %1139 = vmatprep.subr.bf16.mxu0 0
  %1140 = vmatpush1.bf16.msra.mxu0 %v1119
  %1141 = vmatprep.subr.bf16.mxu0 0
  %1142 = vmatpush1.bf16.msra.mxu0 %v1120
  %1143 = vmatprep.subr.bf16.mxu0 0
  %1144 = vmatpush1.bf16.msra.mxu0 %v1121
  %1145 = vmatprep.subr.bf16.mxu0 0
  %1146 = vmatpush1.bf16.msra.mxu0 %v1122
  %1147 = vmatprep.subr.bf16.mxu0 0
  %1148 = vmatpush1.bf16.msra.mxu0 0
  %1149 = vmatprep.subr.bf16.mxu0 0
  %1150 = vmatpush1.bf16.msra.mxu0 0
  %1151 = vmatprep.subr.bf16.mxu0 0
  %1152 = vmatpush1.bf16.msra.mxu0 0
  %1153 = vmatprep.subr.bf16.mxu0 0
  %1154 = vmatpush1.bf16.msra.mxu0 0
  %1155 = vmatprep.subr.bf16.mxu0 0
  %1156 = vmatpush1.bf16.msra.mxu0 0
  %1157 = vmatprep.subr.bf16.mxu0 0
  %1158 = vmatpush1.bf16.msra.mxu0 0
  %1159 = vmatprep.subr.bf16.mxu0 0
  %1160 = vmatpush1.bf16.msra.mxu0 0
  %1161 = vmatprep.subr.bf16.mxu0 0
  %1162 = vmatpush1.bf16.msra.mxu0 0
  %1163 = vmatprep.mubr.bf16.mxu0 0
  %1164 = vmatmul.mubr.bf16.gmra.mrb[0].mxu0 %v1022
  %v1165 = vpop.f32.mrb[0].mxu0
  %v1166 = vadd.f32 %v1046, %v1165
  %v1167 = vpop.f32.mrb[0].mxu0
  %v1168 = vpop.f32.mrb[0].mxu0
  %v1169 = vadd.f32 %v1046, %v1168
  %v1170 = vpop.f32.mrb[0].mxu0
  %1171 = vmatprep.mubr.bf16.mxu0 0
  %1172 = vmatmul.mubr.bf16.gmra.mrb[0].mxu0 %v1023
  %v1173 = vpop.f32.mrb[0].mxu0
  %v1174 = vadd.f32 %v1046, %v1173
  %v1175 = vpop.f32.mrb[0].mxu0
  %v1176 = vpop.f32.mrb[0].mxu0
  %v1177 = vadd.f32 %v1046, %v1176
  %v1178 = vpop.f32.mrb[0].mxu0
  %1179 = vmatprep.mubr.bf16.mxu0 0
  %1180 = vmatmul.mubr.bf16.gmra.mrb[0].mxu0 %v1024
  %v1181 = vpop.f32.mrb[0].mxu0
  %v1182 = vadd.f32 %v1046, %v1181
  %v1183 = vpop.f32.mrb[0].mxu0
  %v1184 = vpop.f32.mrb[0].mxu0
  %v1185 = vadd.f32 %v1046, %v1184
  %v1186 = vpop.f32.mrb[0].mxu0
  %1187 = vmatprep.mubr.bf16.mxu0 0
  %1188 = vmatmul.mubr.bf16.gmra.mrb[0].mxu0 %v1025
  %v1189 = vpop.f32.mrb[0].mxu0
  %v1190 = vadd.f32 %v1046, %v1189
  %v1191 = vpop.f32.mrb[0].mxu0
  %v1192 = vpop.f32.mrb[0].mxu0
  %v1193 = vadd.f32 %v1046, %v1192
  %v1194 = vpop.f32.mrb[0].mxu0
  %1195 = vmatprep.mubr.bf16.mxu0 0
  %1196 = vmatmul.mubr.bf16.gmra.mrb[0].mxu0 %v1026
  %v1197 = vpop.f32.mrb[0].mxu0
  %v1198 = vadd.f32 %v1046, %v1197
  %v1199 = vpop.f32.mrb[0].mxu0
  %v1200 = vpop.f32.mrb[0].mxu0
  %v1201 = vadd.f32 %v1046, %v1200
  %v1202 = vpop.f32.mrb[0].mxu0
  %1203 = vmatprep.mubr.bf16.mxu0 0
  %1204 = vmatmul.mubr.bf16.gmra.mrb[0].mxu0 %v1027
  %v1205 = vpop.f32.mrb[0].mxu0
  %v1206 = vadd.f32 %v1046, %v1205
  %v1207 = vpop.f32.mrb[0].mxu0
  %v1208 = vpop.f32.mrb[0].mxu0
  %v1209 = vadd.f32 %v1046, %v1208
  %v1210 = vpop.f32.mrb[0].mxu0
  %1211 = vmatprep.mubr.bf16.mxu0 0
  %1212 = vmatmul.mubr.bf16.gmra.mrb[0].mxu0 %v1028
  %v1213 = vpop.f32.mrb[0].mxu0
  %v1214 = vadd.f32 %v1046, %v1213
  %v1215 = vpop.f32.mrb[0].mxu0
  %v1216 = vpop.f32.mrb[0].mxu0
  %v1217 = vadd.f32 %v1046, %v1216
  %v1218 = vpop.f32.mrb[0].mxu0
  %1219 = vmatprep.mubr.bf16.mxu0 0
  %1220 = vmatmul.mubr.bf16.gmra.mrb[0].mxu0 %v1029
  %v1221 = vpop.f32.mrb[0].mxu0
  %v1222 = vadd.f32 %v1046, %v1221
  %v1223 = vpop.f32.mrb[0].mxu0
  %v1224 = vpop.f32.mrb[0].mxu0
  %v1225 = vadd.f32 %v1046, %v1224
  %v1226 = vpop.f32.mrb[0].mxu0
  %1227 = vdwg.mxu0
  %1228 = vadd.xlane.f32.xlu0 %v1166
  %v1229 = vpop.xlane.xlu0 %1228
  %1230 = vadd.xlane.f32.xlu0 %v1169
  %v1231 = vpop.xlane.xlu0 %1230
  %1232 = vadd.xlane.f32.xlu0 %v1174
  %v1233 = vpop.xlane.xlu0 %1232
  %1234 = vadd.xlane.f32.xlu0 %v1177
  %v1235 = vpop.xlane.xlu0 %1234
  %1236 = vadd.xlane.f32.xlu0 %v1182
  %v1237 = vpop.xlane.xlu0 %1236
  %1238 = vadd.xlane.f32.xlu0 %v1185
  %v1239 = vpop.xlane.xlu0 %1238
  %1240 = vadd.xlane.f32.xlu0 %v1190
  %v1241 = vpop.xlane.xlu0 %1240
  %1242 = vadd.xlane.f32.xlu0 %v1193
  %v1243 = vpop.xlane.xlu0 %1242
  %1244 = vadd.xlane.f32.xlu0 %v1198
  %v1245 = vpop.xlane.xlu0 %1244
  %1246 = vadd.xlane.f32.xlu0 %v1201
  %v1247 = vpop.xlane.xlu0 %1246
  %1248 = vadd.xlane.f32.xlu0 %v1206
  %v1249 = vpop.xlane.xlu0 %1248
  %1250 = vadd.xlane.f32.xlu0 %v1209
  %v1251 = vpop.xlane.xlu0 %1250
  %1252 = vadd.xlane.f32.xlu0 %v1214
  %v1253 = vpop.xlane.xlu0 %1252
  %1254 = vadd.xlane.f32.xlu0 %v1217
  %v1255 = vpop.xlane.xlu0 %1254
  %1256 = vadd.xlane.f32.xlu0 %v1222
  %v1257 = vpop.xlane.xlu0 %1256
  %1258 = vadd.xlane.f32.xlu0 %v1225
  %v1259 = vpop.xlane.xlu0 %1258
  %v1260 = vmul.f32 %v1229, 0.03125
  %v1261 = vmul.f32 %v1231, 0.03125
  %v1262 = vmul.f32 %v1233, 0.03125
  %v1263 = vmul.f32 %v1235, 0.03125
  %v1264 = vmul.f32 %v1237, 0.03125
  %v1265 = vmul.f32 %v1239, 0.03125
  %v1266 = vmul.f32 %v1241, 0.03125
  %v1267 = vmul.f32 %v1243, 0.03125
  %v1268 = vmul.f32 %v1245, 0.03125
  %v1269 = vmul.f32 %v1247, 0.03125
  %v1270 = vmul.f32 %v1249, 0.03125
  %v1271 = vmul.f32 %v1251, 0.03125
  %v1272 = vmul.f32 %v1253, 0.03125
  %v1273 = vmul.f32 %v1255, 0.03125
  %v1274 = vmul.f32 %v1257, 0.03125
  %v1275 = vmul.f32 %v1259, 0.03125
  %v1276 = vmul.f32 %v1166, %v1166
  %v1277 = vmul.f32 %v1169, %v1169
  %v1278 = vmul.f32 %v1174, %v1174
  %v1279 = vmul.f32 %v1177, %v1177
  %v1280 = vmul.f32 %v1182, %v1182
  %v1281 = vmul.f32 %v1185, %v1185
  %v1282 = vmul.f32 %v1190, %v1190
  %v1283 = vmul.f32 %v1193, %v1193
  %v1284 = vmul.f32 %v1198, %v1198
  %v1285 = vmul.f32 %v1201, %v1201
  %v1286 = vmul.f32 %v1206, %v1206
  %v1287 = vmul.f32 %v1209, %v1209
  %v1288 = vmul.f32 %v1214, %v1214
  %v1289 = vmul.f32 %v1217, %v1217
  %v1290 = vmul.f32 %v1222, %v1222
  %v1291 = vmul.f32 %v1225, %v1225
  %1292 = vadd.xlane.f32.xlu0 %v1276
  %v1293 = vpop.xlane.xlu0 %1292
  %1294 = vadd.xlane.f32.xlu0 %v1277
  %v1295 = vpop.xlane.xlu0 %1294
  %1296 = vadd.xlane.f32.xlu0 %v1278
  %v1297 = vpop.xlane.xlu0 %1296
  %1298 = vadd.xlane.f32.xlu0 %v1279
  %v1299 = vpop.xlane.xlu0 %1298
  %1300 = vadd.xlane.f32.xlu0 %v1280
  %v1301 = vpop.xlane.xlu0 %1300
  %1302 = vadd.xlane.f32.xlu0 %v1281
  %v1303 = vpop.xlane.xlu0 %1302
  %1304 = vadd.xlane.f32.xlu0 %v1282
  %v1305 = vpop.xlane.xlu0 %1304
  %1306 = vadd.xlane.f32.xlu0 %v1283
  %v1307 = vpop.xlane.xlu0 %1306
  %1308 = vadd.xlane.f32.xlu0 %v1284
  %v1309 = vpop.xlane.xlu0 %1308
  %1310 = vadd.xlane.f32.xlu0 %v1285
  %v1311 = vpop.xlane.xlu0 %1310
  %1312 = vadd.xlane.f32.xlu0 %v1286
  %v1313 = vpop.xlane.xlu0 %1312
  %1314 = vadd.xlane.f32.xlu0 %v1287
  %v1315 = vpop.xlane.xlu0 %1314
  %1316 = vadd.xlane.f32.xlu0 %v1288
  %v1317 = vpop.xlane.xlu0 %1316
  %1318 = vadd.xlane.f32.xlu0 %v1289
  %v1319 = vpop.xlane.xlu0 %1318
  %1320 = vadd.xlane.f32.xlu0 %v1290
  %v1321 = vpop.xlane.xlu0 %1320
  %1322 = vadd.xlane.f32.xlu0 %v1291
  %v1323 = vpop.xlane.xlu0 %1322
  %v1324 = vmul.f32 %v1293, 0.03125
  %v1325 = vmul.f32 %v1295, 0.03125
  %v1326 = vmul.f32 %v1297, 0.03125
  %v1327 = vmul.f32 %v1299, 0.03125
  %v1328 = vmul.f32 %v1301, 0.03125
  %v1329 = vmul.f32 %v1303, 0.03125
  %v1330 = vmul.f32 %v1305, 0.03125
  %v1331 = vmul.f32 %v1307, 0.03125
  %v1332 = vmul.f32 %v1309, 0.03125
  %v1333 = vmul.f32 %v1311, 0.03125
  %v1334 = vmul.f32 %v1313, 0.03125
  %v1335 = vmul.f32 %v1315, 0.03125
  %v1336 = vmul.f32 %v1317, 0.03125
  %v1337 = vmul.f32 %v1319, 0.03125
  %v1338 = vmul.f32 %v1321, 0.03125
  %v1339 = vmul.f32 %v1323, 0.03125
  %v1340 = vmul.f32 %v1260, %v1260
  %v1341 = vmul.f32 %v1261, %v1261
  %v1342 = vmul.f32 %v1262, %v1262
  %v1343 = vmul.f32 %v1263, %v1263
  %v1344 = vmul.f32 %v1264, %v1264
  %v1345 = vmul.f32 %v1265, %v1265
  %v1346 = vmul.f32 %v1266, %v1266
  %v1347 = vmul.f32 %v1267, %v1267
  %v1348 = vmul.f32 %v1268, %v1268
  %v1349 = vmul.f32 %v1269, %v1269
  %v1350 = vmul.f32 %v1270, %v1270
  %v1351 = vmul.f32 %v1271, %v1271
  %v1352 = vmul.f32 %v1272, %v1272
  %v1353 = vmul.f32 %v1273, %v1273
  %v1354 = vmul.f32 %v1274, %v1274
  %v1355 = vmul.f32 %v1275, %v1275
  %v1356 = vsub.f32 %v1324, %v1340
  %v1357 = vsub.f32 %v1325, %v1341
  %v1358 = vsub.f32 %v1326, %v1342
  %v1359 = vsub.f32 %v1327, %v1343
  %v1360 = vsub.f32 %v1328, %v1344
  %v1361 = vsub.f32 %v1329, %v1345
  %v1362 = vsub.f32 %v1330, %v1346
  %v1363 = vsub.f32 %v1331, %v1347
  %v1364 = vsub.f32 %v1332, %v1348
  %v1365 = vsub.f32 %v1333, %v1349
  %v1366 = vsub.f32 %v1334, %v1350
  %v1367 = vsub.f32 %v1335, %v1351
  %v1368 = vsub.f32 %v1336, %v1352
  %v1369 = vsub.f32 %v1337, %v1353
  %v1370 = vsub.f32 %v1338, %v1354
  %v1371 = vsub.f32 %v1339, %v1355
  %v1372 = vmax.f32 %v1356, 0.0
  %v1373 = vmax.f32 %v1357, 0.0
  %v1374 = vmax.f32 %v1358, 0.0
  %v1375 = vmax.f32 %v1359, 0.0
  %v1376 = vmax.f32 %v1360, 0.0
  %v1377 = vmax.f32 %v1361, 0.0
  %v1378 = vmax.f32 %v1362, 0.0
  %v1379 = vmax.f32 %v1363, 0.0
  %v1380 = vmax.f32 %v1364, 0.0
  %v1381 = vmax.f32 %v1365, 0.0
  %v1382 = vmax.f32 %v1366, 0.0
  %v1383 = vmax.f32 %v1367, 0.0
  %v1384 = vmax.f32 %v1368, 0.0
  %v1385 = vmax.f32 %v1369, 0.0
  %v1386 = vmax.f32 %v1370, 0.0
  %v1387 = vmax.f32 %v1371, 0.0
  %v1388 = vsub.f32 %v1166, %v1260
  %v1389 = vsub.f32 %v1169, %v1261
  %v1390 = vsub.f32 %v1174, %v1262
  %v1391 = vsub.f32 %v1177, %v1263
  %v1392 = vsub.f32 %v1182, %v1264
  %v1393 = vsub.f32 %v1185, %v1265
  %v1394 = vsub.f32 %v1190, %v1266
  %v1395 = vsub.f32 %v1193, %v1267
  %v1396 = vsub.f32 %v1198, %v1268
  %v1397 = vsub.f32 %v1201, %v1269
  %v1398 = vsub.f32 %v1206, %v1270
  %v1399 = vsub.f32 %v1209, %v1271
  %v1400 = vsub.f32 %v1214, %v1272
  %v1401 = vsub.f32 %v1217, %v1273
  %v1402 = vsub.f32 %v1222, %v1274
  %v1403 = vsub.f32 %v1225, %v1275
  %v1404 = vadd.f32 %v1372, 1e-05
  %v1405 = vadd.f32 %v1373, 1e-05
  %v1406 = vadd.f32 %v1374, 1e-05
  %v1407 = vadd.f32 %v1375, 1e-05
  %v1408 = vadd.f32 %v1376, 1e-05
  %v1409 = vadd.f32 %v1377, 1e-05
  %v1410 = vadd.f32 %v1378, 1e-05
  %v1411 = vadd.f32 %v1379, 1e-05
  %v1412 = vadd.f32 %v1380, 1e-05
  %v1413 = vadd.f32 %v1381, 1e-05
  %v1414 = vadd.f32 %v1382, 1e-05
  %v1415 = vadd.f32 %v1383, 1e-05
  %v1416 = vadd.f32 %v1384, 1e-05
  %v1417 = vadd.f32 %v1385, 1e-05
  %v1418 = vadd.f32 %v1386, 1e-05
  %v1419 = vadd.f32 %v1387, 1e-05
  %v1420 = vrsqrt.pop %v1404
  %v1421 = vrsqrt.pop %v1405
  %v1422 = vrsqrt.pop %v1406
  %v1423 = vrsqrt.pop %v1407
  %v1424 = vrsqrt.pop %v1408
  %v1425 = vrsqrt.pop %v1409
  %v1426 = vrsqrt.pop %v1410
  %v1427 = vrsqrt.pop %v1411
  %v1428 = vrsqrt.pop %v1412
  %v1429 = vrsqrt.pop %v1413
  %v1430 = vrsqrt.pop %v1414
  %v1431 = vrsqrt.pop %v1415
  %v1432 = vrsqrt.pop %v1416
  %v1433 = vrsqrt.pop %v1417
  %v1434 = vrsqrt.pop %v1418
  %v1435 = vrsqrt.pop %v1419
  %v1436 = vmul.f32 %v1388, %v1420
  %v1437 = vmul.f32 %v1389, %v1421
  %v1438 = vmul.f32 %v1390, %v1422
  %v1439 = vmul.f32 %v1391, %v1423
  %v1440 = vmul.f32 %v1392, %v1424
  %v1441 = vmul.f32 %v1393, %v1425
  %v1442 = vmul.f32 %v1394, %v1426
  %v1443 = vmul.f32 %v1395, %v1427
  %v1444 = vmul.f32 %v1396, %v1428
  %v1445 = vmul.f32 %v1397, %v1429
  %v1446 = vmul.f32 %v1398, %v1430
  %v1447 = vmul.f32 %v1399, %v1431
  %v1448 = vmul.f32 %v1400, %v1432
  %v1449 = vmul.f32 %v1401, %v1433
  %v1450 = vmul.f32 %v1402, %v1434
  %v1451 = vmul.f32 %v1403, %v1435
  %v1452 = vmul.f32 %v1436, %v1047
  %v1453 = vmul.f32 %v1437, %v1047
  %v1454 = vmul.f32 %v1438, %v1047
  %v1455 = vmul.f32 %v1439, %v1047
  %v1456 = vmul.f32 %v1440, %v1047
  %v1457 = vmul.f32 %v1441, %v1047
  %v1458 = vmul.f32 %v1442, %v1047
  %v1459 = vmul.f32 %v1443, %v1047
  %v1460 = vmul.f32 %v1444, %v1047
  %v1461 = vmul.f32 %v1445, %v1047
  %v1462 = vmul.f32 %v1446, %v1047
  %v1463 = vmul.f32 %v1447, %v1047
  %v1464 = vmul.f32 %v1448, %v1047
  %v1465 = vmul.f32 %v1449, %v1047
  %v1466 = vmul.f32 %v1450, %v1047
  %v1467 = vmul.f32 %v1451, %v1047
  %v1468 = vadd.f32 %v1452, %v1048
  %v1469 = vadd.f32 %v1453, %v1048
  %v1470 = vadd.f32 %v1454, %v1048
  %v1471 = vadd.f32 %v1455, %v1048
  %v1472 = vadd.f32 %v1456, %v1048
  %v1473 = vadd.f32 %v1457, %v1048
  %v1474 = vadd.f32 %v1458, %v1048
  %v1475 = vadd.f32 %v1459, %v1048
  %v1476 = vadd.f32 %v1460, %v1048
  %v1477 = vadd.f32 %v1461, %v1048
  %v1478 = vadd.f32 %v1462, %v1048
  %v1479 = vadd.f32 %v1463, %v1048
  %v1480 = vadd.f32 %v1464, %v1048
  %v1481 = vadd.f32 %v1465, %v1048
  %v1482 = vadd.f32 %v1466, %v1048
  %v1483 = vadd.f32 %v1467, %v1048
  %v1484 = vpack.c.bf16 %v1469, %v1468
  %v1485 = vpack.c.bf16 %v1471, %v1470
  %v1486 = vpack.c.bf16 %v1473, %v1472
  %v1487 = vpack.c.bf16 %v1475, %v1474
  %v1488 = vpack.c.bf16 %v1477, %v1476
  %v1489 = vpack.c.bf16 %v1479, %v1478
  %v1490 = vpack.c.bf16 %v1481, %v1480
  %v1491 = vpack.c.bf16 %v1483, %v1482
  %v1508 = vunpack.c.l.b16 %v1049
  %v1509 = vunpack.c.l.b16 %v1050
  %v1510 = vunpack.c.l.b16 %v1051
  %v1511 = vunpack.c.l.b16 %v1052
  %v1512 = vunpack.c.l.b16 %v1053
  %v1513 = vunpack.c.l.b16 %v1054
  %v1514 = vunpack.c.l.b16 %v1055
  %v1515 = vunpack.c.l.b16 %v1056
  %v1516 = vunpack.c.l.b16 %v1057
  %v1517 = vunpack.c.l.b16 %v1058
  %v1518 = vunpack.c.l.b16 %v1059
  %v1519 = vunpack.c.l.b16 %v1060
  %v1520 = vunpack.c.l.b16 %v1061
  %v1521 = vunpack.c.l.b16 %v1062
  %v1522 = vunpack.c.l.b16 %v1063
  %v1523 = vunpack.c.l.b16 %v1064
  %v1524 = vpack.c.b16 %v1509, %v1508
  %v1525 = vpack.c.b16 %v1511, %v1510
  %v1526 = vpack.c.b16 %v1513, %v1512
  %v1527 = vpack.c.b16 %v1515, %v1514
  %v1528 = vpack.c.b16 %v1517, %v1516
  %v1529 = vpack.c.b16 %v1519, %v1518
  %v1530 = vpack.c.b16 %v1521, %v1520
  %v1531 = vpack.c.b16 %v1523, %v1522
  %1540 = vmatprep.subr.bf16.mxu0 0
  %1541 = vmatpush1.bf16.msra.mxu0 %v1524
  %1542 = vmatprep.subr.bf16.mxu0 0
  %1543 = vmatpush1.bf16.msra.mxu0 %v1525
  %1544 = vmatprep.subr.bf16.mxu0 0
  %1545 = vmatpush1.bf16.msra.mxu0 %v1526
  %1546 = vmatprep.subr.bf16.mxu0 0
  %1547 = vmatpush1.bf16.msra.mxu0 %v1527
  %1548 = vmatprep.subr.bf16.mxu0 0
  %1549 = vmatpush1.bf16.msra.mxu0 %v1528
  %1550 = vmatprep.subr.bf16.mxu0 0
  %1551 = vmatpush1.bf16.msra.mxu0 %v1529
  %1552 = vmatprep.subr.bf16.mxu0 0
  %1553 = vmatpush1.bf16.msra.mxu0 %v1530
  %1554 = vmatprep.subr.bf16.mxu0 0
  %1555 = vmatpush1.bf16.msra.mxu0 %v1531
  %1556 = vmatprep.subr.bf16.mxu0 0
  %1557 = vmatpush1.bf16.msra.mxu0 0
  %1558 = vmatprep.subr.bf16.mxu0 0
  %1559 = vmatpush1.bf16.msra.mxu0 0
  %1560 = vmatprep.subr.bf16.mxu0 0
  %1561 = vmatpush1.bf16.msra.mxu0 0
  %1562 = vmatprep.subr.bf16.mxu0 0
  %1563 = vmatpush1.bf16.msra.mxu0 0
  %1564 = vmatprep.subr.bf16.mxu0 0
  %1565 = vmatpush1.bf16.msra.mxu0 0
  %1566 = vmatprep.subr.bf16.mxu0 0
  %1567 = vmatpush1.bf16.msra.mxu0 0
  %1568 = vmatprep.subr.bf16.mxu0 0
  %1569 = vmatpush1.bf16.msra.mxu0 0
  %1570 = vmatprep.subr.bf16.mxu0 0
  %1571 = vmatpush1.bf16.msra.mxu0 0
  %1572 = vmatprep.mubr.bf16.mxu0 0
  %1573 = vmatmul.mubr.bf16.gmra.mrb[0].mxu0 %v1484
  %v1574 = vpop.f32.mrb[0].mxu0
  %v1575 = vadd.f32 %v1065, %v1574
  %v1576 = vpop.f32.mrb[0].mxu0
  %v1577 = vpop.f32.mrb[0].mxu0
  %v1578 = vadd.f32 %v1065, %v1577
  %v1579 = vpop.f32.mrb[0].mxu0
  %1580 = vmatprep.mubr.bf16.mxu0 0
  %1581 = vmatmul.mubr.bf16.gmra.mrb[0].mxu0 %v1485
  %v1582 = vpop.f32.mrb[0].mxu0
  %v1583 = vadd.f32 %v1065, %v1582
  %v1584 = vpop.f32.mrb[0].mxu0
  %v1585 = vpop.f32.mrb[0].mxu0
  %v1586 = vadd.f32 %v1065, %v1585
  %v1587 = vpop.f32.mrb[0].mxu0
  %1588 = vmatprep.mubr.bf16.mxu0 0
  %1589 = vmatmul.mubr.bf16.gmra.mrb[0].mxu0 %v1486
  %v1590 = vpop.f32.mrb[0].mxu0
  %v1591 = vadd.f32 %v1065, %v1590
  %v1592 = vpop.f32.mrb[0].mxu0
  %v1593 = vpop.f32.mrb[0].mxu0
  %v1594 = vadd.f32 %v1065, %v1593
  %v1595 = vpop.f32.mrb[0].mxu0
  %1596 = vmatprep.mubr.bf16.mxu0 0
  %1597 = vmatmul.mubr.bf16.gmra.mrb[0].mxu0 %v1487
  %v1598 = vpop.f32.mrb[0].mxu0
  %v1599 = vadd.f32 %v1065, %v1598
  %v1600 = vpop.f32.mrb[0].mxu0
  %v1601 = vpop.f32.mrb[0].mxu0
  %v1602 = vadd.f32 %v1065, %v1601
  %v1603 = vpop.f32.mrb[0].mxu0
  %1604 = vmatprep.mubr.bf16.mxu0 0
  %1605 = vmatmul.mubr.bf16.gmra.mrb[0].mxu0 %v1488
  %v1606 = vpop.f32.mrb[0].mxu0
  %v1607 = vadd.f32 %v1065, %v1606
  %v1608 = vpop.f32.mrb[0].mxu0
  %v1609 = vpop.f32.mrb[0].mxu0
  %v1610 = vadd.f32 %v1065, %v1609
  %v1611 = vpop.f32.mrb[0].mxu0
  %1612 = vmatprep.mubr.bf16.mxu0 0
  %1613 = vmatmul.mubr.bf16.gmra.mrb[0].mxu0 %v1489
  %v1614 = vpop.f32.mrb[0].mxu0
  %v1615 = vadd.f32 %v1065, %v1614
  %v1616 = vpop.f32.mrb[0].mxu0
  %v1617 = vpop.f32.mrb[0].mxu0
  %v1618 = vadd.f32 %v1065, %v1617
  %v1619 = vpop.f32.mrb[0].mxu0
  %1620 = vmatprep.mubr.bf16.mxu0 0
  %1621 = vmatmul.mubr.bf16.gmra.mrb[0].mxu0 %v1490
  %v1622 = vpop.f32.mrb[0].mxu0
  %v1623 = vadd.f32 %v1065, %v1622
  %v1624 = vpop.f32.mrb[0].mxu0
  %v1625 = vpop.f32.mrb[0].mxu0
  %v1626 = vadd.f32 %v1065, %v1625
  %v1627 = vpop.f32.mrb[0].mxu0
  %1628 = vmatprep.mubr.bf16.mxu0 0
  %1629 = vmatmul.mubr.bf16.gmra.mrb[0].mxu0 %v1491
  %v1630 = vpop.f32.mrb[0].mxu0
  %v1631 = vadd.f32 %v1065, %v1630
  %v1632 = vpop.f32.mrb[0].mxu0
  %v1633 = vpop.f32.mrb[0].mxu0
  %v1634 = vadd.f32 %v1065, %v1633
  %v1635 = vpop.f32.mrb[0].mxu0
  %1636 = vdwg.mxu0
  %v1637 = vmax.f32 %v1575, 0.0
  %v1638 = vmax.f32 %v1578, 0.0
  %v1639 = vmax.f32 %v1583, 0.0
  %v1640 = vmax.f32 %v1586, 0.0
  %v1641 = vmax.f32 %v1591, 0.0
  %v1642 = vmax.f32 %v1594, 0.0
  %v1643 = vmax.f32 %v1599, 0.0
  %v1644 = vmax.f32 %v1602, 0.0
  %v1645 = vmax.f32 %v1607, 0.0
  %v1646 = vmax.f32 %v1610, 0.0
  %v1647 = vmax.f32 %v1615, 0.0
  %v1648 = vmax.f32 %v1618, 0.0
  %v1649 = vmax.f32 %v1623, 0.0
  %v1650 = vmax.f32 %v1626, 0.0
  %v1651 = vmax.f32 %v1631, 0.0
  %v1652 = vmax.f32 %v1634, 0.0
  %v1653 = vpack.c.bf16 %v1638, %v1637
  %v1654 = vpack.c.bf16 %v1640, %v1639
  %v1655 = vpack.c.bf16 %v1642, %v1641
  %v1656 = vpack.c.bf16 %v1644, %v1643
  %v1657 = vpack.c.bf16 %v1646, %v1645
  %v1658 = vpack.c.bf16 %v1648, %v1647
  %v1659 = vpack.c.bf16 %v1650, %v1649
  %v1660 = vpack.c.bf16 %v1652, %v1651
  %v1677 = vunpack.c.l.b16 %v1066
  %v1678 = vunpack.c.l.b16 %v1067
  %v1679 = vunpack.c.l.b16 %v1068
  %v1680 = vunpack.c.l.b16 %v1069
  %v1681 = vunpack.c.l.b16 %v1070
  %v1682 = vunpack.c.l.b16 %v1071
  %v1683 = vunpack.c.l.b16 %v1072
  %v1684 = vunpack.c.l.b16 %v1073
  %v1685 = vunpack.c.l.b16 %v1074
  %v1686 = vunpack.c.l.b16 %v1075
  %v1687 = vunpack.c.l.b16 %v1076
  %v1688 = vunpack.c.l.b16 %v1077
  %v1689 = vunpack.c.l.b16 %v1078
  %v1690 = vunpack.c.l.b16 %v1079
  %v1691 = vunpack.c.l.b16 %v1080
  %v1692 = vunpack.c.l.b16 %v1081
  %v1693 = vpack.c.b16 %v1678, %v1677
  %v1694 = vpack.c.b16 %v1680, %v1679
  %v1695 = vpack.c.b16 %v1682, %v1681
  %v1696 = vpack.c.b16 %v1684, %v1683
  %v1697 = vpack.c.b16 %v1686, %v1685
  %v1698 = vpack.c.b16 %v1688, %v1687
  %v1699 = vpack.c.b16 %v1690, %v1689
  %v1700 = vpack.c.b16 %v1692, %v1691
  %1709 = vmatprep.subr.bf16.mxu0 0
  %1710 = vmatpush1.bf16.msra.mxu0 %v1693
  %1711 = vmatprep.subr.bf16.mxu0 0
  %1712 = vmatpush1.bf16.msra.mxu0 %v1694
  %1713 = vmatprep.subr.bf16.mxu0 0
  %1714 = vmatpush1.bf16.msra.mxu0 %v1695
  %1715 = vmatprep.subr.bf16.mxu0 0
  %1716 = vmatpush1.bf16.msra.mxu0 %v1696
  %1717 = vmatprep.subr.bf16.mxu0 0
  %1718 = vmatpush1.bf16.msra.mxu0 %v1697
  %1719 = vmatprep.subr.bf16.mxu0 0
  %1720 = vmatpush1.bf16.msra.mxu0 %v1698
  %1721 = vmatprep.subr.bf16.mxu0 0
  %1722 = vmatpush1.bf16.msra.mxu0 %v1699
  %1723 = vmatprep.subr.bf16.mxu0 0
  %1724 = vmatpush1.bf16.msra.mxu0 %v1700
  %1725 = vmatprep.subr.bf16.mxu0 0
  %1726 = vmatpush1.bf16.msra.mxu0 0
  %1727 = vmatprep.subr.bf16.mxu0 0
  %1728 = vmatpush1.bf16.msra.mxu0 0
  %1729 = vmatprep.subr.bf16.mxu0 0
  %1730 = vmatpush1.bf16.msra.mxu0 0
  %1731 = vmatprep.subr.bf16.mxu0 0
  %1732 = vmatpush1.bf16.msra.mxu0 0
  %1733 = vmatprep.subr.bf16.mxu0 0
  %1734 = vmatpush1.bf16.msra.mxu0 0
  %1735 = vmatprep.subr.bf16.mxu0 0
  %1736 = vmatpush1.bf16.msra.mxu0 0
  %1737 = vmatprep.subr.bf16.mxu0 0
  %1738 = vmatpush1.bf16.msra.mxu0 0
  %1739 = vmatprep.subr.bf16.mxu0 0
  %1740 = vmatpush1.bf16.msra.mxu0 0
  %1741 = vmatprep.mubr.bf16.mxu0 0
  %1742 = vmatmul.mubr.bf16.gmra.mrb[0].mxu0 %v1653
  %v1743 = vpop.f32.mrb[0].mxu0
  %v1744 = vadd.f32 %v1082, %v1743
  %v1745 = vpop.f32.mrb[0].mxu0
  %v1746 = vpop.f32.mrb[0].mxu0
  %v1747 = vadd.f32 %v1082, %v1746
  %v1748 = vpop.f32.mrb[0].mxu0
  %1749 = vmatprep.mubr.bf16.mxu0 0
  %1750 = vmatmul.mubr.bf16.gmra.mrb[0].mxu0 %v1654
  %v1751 = vpop.f32.mrb[0].mxu0
  %v1752 = vadd.f32 %v1082, %v1751
  %v1753 = vpop.f32.mrb[0].mxu0
  %v1754 = vpop.f32.mrb[0].mxu0
  %v1755 = vadd.f32 %v1082, %v1754
  %v1756 = vpop.f32.mrb[0].mxu0
  %1757 = vmatprep.mubr.bf16.mxu0 0
  %1758 = vmatmul.mubr.bf16.gmra.mrb[0].mxu0 %v1655
  %v1759 = vpop.f32.mrb[0].mxu0
  %v1760 = vadd.f32 %v1082, %v1759
  %v1761 = vpop.f32.mrb[0].mxu0
  %v1762 = vpop.f32.mrb[0].mxu0
  %v1763 = vadd.f32 %v1082, %v1762
  %v1764 = vpop.f32.mrb[0].mxu0
  %1765 = vmatprep.mubr.bf16.mxu0 0
  %1766 = vmatmul.mubr.bf16.gmra.mrb[0].mxu0 %v1656
  %v1767 = vpop.f32.mrb[0].mxu0
  %v1768 = vadd.f32 %v1082, %v1767
  %v1769 = vpop.f32.mrb[0].mxu0
  %v1770 = vpop.f32.mrb[0].mxu0
  %v1771 = vadd.f32 %v1082, %v1770
  %v1772 = vpop.f32.mrb[0].mxu0
  %1773 = vmatprep.mubr.bf16.mxu0 0
  %1774 = vmatmul.mubr.bf16.gmra.mrb[0].mxu0 %v1657
  %v1775 = vpop.f32.mrb[0].mxu0
  %v1776 = vadd.f32 %v1082, %v1775
  %v1777 = vpop.f32.mrb[0].mxu0
  %v1778 = vpop.f32.mrb[0].mxu0
  %v1779 = vadd.f32 %v1082, %v1778
  %v1780 = vpop.f32.mrb[0].mxu0
  %1781 = vmatprep.mubr.bf16.mxu0 0
  %1782 = vmatmul.mubr.bf16.gmra.mrb[0].mxu0 %v1658
  %v1783 = vpop.f32.mrb[0].mxu0
  %v1784 = vadd.f32 %v1082, %v1783
  %v1785 = vpop.f32.mrb[0].mxu0
  %v1786 = vpop.f32.mrb[0].mxu0
  %v1787 = vadd.f32 %v1082, %v1786
  %v1788 = vpop.f32.mrb[0].mxu0
  %1789 = vmatprep.mubr.bf16.mxu0 0
  %1790 = vmatmul.mubr.bf16.gmra.mrb[0].mxu0 %v1659
  %v1791 = vpop.f32.mrb[0].mxu0
  %v1792 = vadd.f32 %v1082, %v1791
  %v1793 = vpop.f32.mrb[0].mxu0
  %v1794 = vpop.f32.mrb[0].mxu0
  %v1795 = vadd.f32 %v1082, %v1794
  %v1796 = vpop.f32.mrb[0].mxu0
  %1797 = vmatprep.mubr.bf16.mxu0 0
  %1798 = vmatmul.mubr.bf16.gmra.mrb[0].mxu0 %v1660
  %v1799 = vpop.f32.mrb[0].mxu0
  %v1800 = vadd.f32 %v1082, %v1799
  %v1801 = vpop.f32.mrb[0].mxu0
  %v1802 = vpop.f32.mrb[0].mxu0
  %v1803 = vadd.f32 %v1082, %v1802
  %v1804 = vpop.f32.mrb[0].mxu0
  %1805 = vdwg.mxu0
  %v1806 = vadd.f32 %v1744, %v1166
  %v1807 = vadd.f32 %v1747, %v1169
  %v1808 = vadd.f32 %v1752, %v1174
  %v1809 = vadd.f32 %v1755, %v1177
  %v1810 = vadd.f32 %v1760, %v1182
  %v1811 = vadd.f32 %v1763, %v1185
  %v1812 = vadd.f32 %v1768, %v1190
  %v1813 = vadd.f32 %v1771, %v1193
  %v1814 = vadd.f32 %v1776, %v1198
  %v1815 = vadd.f32 %v1779, %v1201
  %v1816 = vadd.f32 %v1784, %v1206
  %v1817 = vadd.f32 %v1787, %v1209
  %v1818 = vadd.f32 %v1792, %v1214
  %v1819 = vadd.f32 %v1795, %v1217
  %v1820 = vadd.f32 %v1800, %v1222
  %v1821 = vadd.f32 %v1803, %v1225
  %v1822 = vlaneseq
  %v1823 = vshrl.u32 %v1822, 7
  %vm1824 = vcmp.gt.s32.totalorder %v1823, 0
  %v1825 = vsel %vm1824, %v1806, 0.0
  %v1826 = vsel %vm1824, %v1807, 0.0
  %v1827 = vsel %vm1824, %v1808, 0.0
  %v1828 = vsel %vm1824, %v1809, 0.0
  %v1829 = vsel %vm1824, %v1810, 0.0
  %v1830 = vsel %vm1824, %v1811, 0.0
  %v1831 = vsel %vm1824, %v1812, 0.0
  %v1832 = vsel %vm1824, %v1813, 0.0
  %v1833 = vsel %vm1824, %v1814, 0.0
  %v1834 = vsel %vm1824, %v1815, 0.0
  %v1835 = vsel %vm1824, %v1816, 0.0
  %v1836 = vsel %vm1824, %v1817, 0.0
  %v1837 = vsel %vm1824, %v1818, 0.0
  %v1838 = vsel %vm1824, %v1819, 0.0
  %v1839 = vsel %vm1824, %v1820, 0.0
  %v1840 = vsel %vm1824, %v1821, 0.0
  %v1841 = vrot.slane %v1825, 4
  %v1842 = vadd.f32 %v1825, %v1841
  %v1843 = vrot.slane %v1842, 2
  %v1844 = vadd.f32 %v1842, %v1843
  %v1845 = vrot.slane %v1844, 1
  %v1846 = vadd.f32 %v1844, %v1845
  %v1847 = vrot.slane %v1826, 4
  %v1848 = vadd.f32 %v1826, %v1847
  %v1849 = vrot.slane %v1848, 2
  %v1850 = vadd.f32 %v1848, %v1849
  %v1851 = vrot.slane %v1850, 1
  %v1852 = vadd.f32 %v1850, %v1851
  %v1853 = vrot.slane %v1827, 4
  %v1854 = vadd.f32 %v1827, %v1853
  %v1855 = vrot.slane %v1854, 2
  %v1856 = vadd.f32 %v1854, %v1855
  %v1857 = vrot.slane %v1856, 1
  %v1858 = vadd.f32 %v1856, %v1857
  %v1859 = vrot.slane %v1828, 4
  %v1860 = vadd.f32 %v1828, %v1859
  %v1861 = vrot.slane %v1860, 2
  %v1862 = vadd.f32 %v1860, %v1861
  %v1863 = vrot.slane %v1862, 1
  %v1864 = vadd.f32 %v1862, %v1863
  %v1865 = vrot.slane %v1829, 4
  %v1866 = vadd.f32 %v1829, %v1865
  %v1867 = vrot.slane %v1866, 2
  %v1868 = vadd.f32 %v1866, %v1867
  %v1869 = vrot.slane %v1868, 1
  %v1870 = vadd.f32 %v1868, %v1869
  %v1871 = vrot.slane %v1830, 4
  %v1872 = vadd.f32 %v1830, %v1871
  %v1873 = vrot.slane %v1872, 2
  %v1874 = vadd.f32 %v1872, %v1873
  %v1875 = vrot.slane %v1874, 1
  %v1876 = vadd.f32 %v1874, %v1875
  %v1877 = vrot.slane %v1831, 4
  %v1878 = vadd.f32 %v1831, %v1877
  %v1879 = vrot.slane %v1878, 2
  %v1880 = vadd.f32 %v1878, %v1879
  %v1881 = vrot.slane %v1880, 1
  %v1882 = vadd.f32 %v1880, %v1881
  %v1883 = vrot.slane %v1832, 4
  %v1884 = vadd.f32 %v1832, %v1883
  %v1885 = vrot.slane %v1884, 2
  %v1886 = vadd.f32 %v1884, %v1885
  %v1887 = vrot.slane %v1886, 1
  %v1888 = vadd.f32 %v1886, %v1887
  %v1889 = vrot.slane %v1833, 4
  %v1890 = vadd.f32 %v1833, %v1889
  %v1891 = vrot.slane %v1890, 2
  %v1892 = vadd.f32 %v1890, %v1891
  %v1893 = vrot.slane %v1892, 1
  %v1894 = vadd.f32 %v1892, %v1893
  %v1895 = vrot.slane %v1834, 4
  %v1896 = vadd.f32 %v1834, %v1895
  %v1897 = vrot.slane %v1896, 2
  %v1898 = vadd.f32 %v1896, %v1897
  %v1899 = vrot.slane %v1898, 1
  %v1900 = vadd.f32 %v1898, %v1899
  %v1901 = vrot.slane %v1835, 4
  %v1902 = vadd.f32 %v1835, %v1901
  %v1903 = vrot.slane %v1902, 2
  %v1904 = vadd.f32 %v1902, %v1903
  %v1905 = vrot.slane %v1904, 1
  %v1906 = vadd.f32 %v1904, %v1905
  %v1907 = vrot.slane %v1836, 4
  %v1908 = vadd.f32 %v1836, %v1907
  %v1909 = vrot.slane %v1908, 2
  %v1910 = vadd.f32 %v1908, %v1909
  %v1911 = vrot.slane %v1910, 1
  %v1912 = vadd.f32 %v1910, %v1911
  %v1913 = vrot.slane %v1837, 4
  %v1914 = vadd.f32 %v1837, %v1913
  %v1915 = vrot.slane %v1914, 2
  %v1916 = vadd.f32 %v1914, %v1915
  %v1917 = vrot.slane %v1916, 1
  %v1918 = vadd.f32 %v1916, %v1917
  %v1919 = vrot.slane %v1838, 4
  %v1920 = vadd.f32 %v1838, %v1919
  %v1921 = vrot.slane %v1920, 2
  %v1922 = vadd.f32 %v1920, %v1921
  %v1923 = vrot.slane %v1922, 1
  %v1924 = vadd.f32 %v1922, %v1923
  %v1925 = vrot.slane %v1839, 4
  %v1926 = vadd.f32 %v1839, %v1925
  %v1927 = vrot.slane %v1926, 2
  %v1928 = vadd.f32 %v1926, %v1927
  %v1929 = vrot.slane %v1928, 1
  %v1930 = vadd.f32 %v1928, %v1929
  %v1931 = vrot.slane %v1840, 4
  %v1932 = vadd.f32 %v1840, %v1931
  %v1933 = vrot.slane %v1932, 2
  %v1934 = vadd.f32 %v1932, %v1933
  %v1935 = vrot.slane %v1934, 1
  %v1936 = vadd.f32 %v1934, %v1935
  %v1937 = vmul.f32 %v1846, 0.25
  %v1938 = vmul.f32 %v1852, 0.25
  %v1939 = vmul.f32 %v1858, 0.25
  %v1940 = vmul.f32 %v1864, 0.25
  %v1941 = vmul.f32 %v1870, 0.25
  %v1942 = vmul.f32 %v1876, 0.25
  %v1943 = vmul.f32 %v1882, 0.25
  %v1944 = vmul.f32 %v1888, 0.25
  %v1945 = vmul.f32 %v1894, 0.25
  %v1946 = vmul.f32 %v1900, 0.25
  %v1947 = vmul.f32 %v1906, 0.25
  %v1948 = vmul.f32 %v1912, 0.25
  %v1949 = vmul.f32 %v1918, 0.25
  %v1950 = vmul.f32 %v1924, 0.25
  %v1951 = vmul.f32 %v1930, 0.25
  %v1952 = vmul.f32 %v1936, 0.25
  %v1953 = vpack.c.bf16 %v1937, %v1937
  %v1954 = vpack.c.bf16 %v1938, %v1938
  %v1955 = vpack.c.bf16 %v1939, %v1939
  %v1956 = vpack.c.bf16 %v1940, %v1940
  %v1957 = vpack.c.bf16 %v1941, %v1941
  %v1958 = vpack.c.bf16 %v1942, %v1942
  %v1959 = vpack.c.bf16 %v1943, %v1943
  %v1960 = vpack.c.bf16 %v1944, %v1944
  %v1961 = vpack.c.bf16 %v1945, %v1945
  %v1962 = vpack.c.bf16 %v1946, %v1946
  %v1963 = vpack.c.bf16 %v1947, %v1947
  %v1964 = vpack.c.bf16 %v1948, %v1948
  %v1965 = vpack.c.bf16 %v1949, %v1949
  %v1966 = vpack.c.bf16 %v1950, %v1950
  %v1967 = vpack.c.bf16 %v1951, %v1951
  %v1968 = vpack.c.bf16 %v1952, %v1952
  %v1969 = vld [vmem:[%s1 + $0x180] sm:$0xf]
  %v1970 = vld [vmem:[%s1 + $0x184] sm:$0xf]
  %v1971 = vld [vmem:[%s1 + $0x188] sm:$0xf]
  %v1972 = vld [vmem:[%s1 + $0x18c] sm:$0xf]
  %v1973 = vld [vmem:[%s1 + $0x190] sm:$0xf]
  %v1974 = vld [vmem:[%s1 + $0x194] sm:$0xf]
  %v1975 = vld [vmem:[%s1 + $0x198] sm:$0xf]
  %v1976 = vld [vmem:[%s1 + $0x19c] sm:$0xf]
  %v1977 = vld [vmem:[%s1 + $0x1a0] sm:$0xf]
  %v1978 = vld [vmem:[%s1 + $0x1a4] sm:$0xf]
  %v1979 = vld [vmem:[%s1 + $0x1a8] sm:$0xf]
  %v1980 = vld [vmem:[%s1 + $0x1ac] sm:$0xf]
  %v1981 = vld [vmem:[%s1 + $0x1b0] sm:$0xf]
  %v1982 = vld [vmem:[%s1 + $0x1b4] sm:$0xf]
  %v1983 = vld [vmem:[%s1 + $0x1b8] sm:$0xf]
  %v1984 = vld [vmem:[%s1 + $0x1bc] sm:$0xf]
  %v1985 = vld [vmem:[%s3 + $0x12] ss:$0 sm:$0xff]
  %v2002 = vunpack.c.l.b16 %v1953
  %v2003 = vunpack.c.l.b16 %v1954
  %v2004 = vunpack.c.l.b16 %v1955
  %v2005 = vunpack.c.l.b16 %v1956
  %v2006 = vunpack.c.l.b16 %v1957
  %v2007 = vunpack.c.l.b16 %v1958
  %v2008 = vunpack.c.l.b16 %v1959
  %v2009 = vunpack.c.l.b16 %v1960
  %v2010 = vunpack.c.l.b16 %v1961
  %v2011 = vunpack.c.l.b16 %v1962
  %v2012 = vunpack.c.l.b16 %v1963
  %v2013 = vunpack.c.l.b16 %v1964
  %v2014 = vunpack.c.l.b16 %v1965
  %v2015 = vunpack.c.l.b16 %v1966
  %v2016 = vunpack.c.l.b16 %v1967
  %v2017 = vunpack.c.l.b16 %v1968
  %vm2018 = vcmask 1041409
  %v2019 = vsel %vm2018, %v2003, %v2002
  %vm2020 = vcmask 1042434
  %v2021 = vsel %vm2020, %v2004, %v2019
  %vm2022 = vcmask 1043459
  %v2023 = vsel %vm2022, %v2005, %v2021
  %vm2024 = vcmask 1044484
  %v2025 = vsel %vm2024, %v2006, %v2023
  %vm2026 = vcmask 1045509
  %v2027 = vsel %vm2026, %v2007, %v2025
  %vm2028 = vcmask 1046534
  %v2029 = vsel %vm2028, %v2008, %v2027
  %vm2030 = vcmask 1047559
  %v2031 = vsel %vm2030, %v2009, %v2029
  %v2032 = vsel %vm2018, %v2011, %v2010
  %v2033 = vsel %vm2020, %v2012, %v2032
  %v2034 = vsel %vm2022, %v2013, %v2033
  %v2035 = vsel %vm2024, %v2014, %v2034
  %v2036 = vsel %vm2026, %v2015, %v2035
  %v2037 = vsel %vm2028, %v2016, %v2036
  %v2038 = vsel %vm2030, %v2017, %v2037
  %v2039 = vpack.c.b16 %v2038, %v2031
  %v2057 = vunpack.c.l.b16 %v1969
  %v2058 = vunpack.c.l.b16 %v1970
  %v2059 = vunpack.c.l.b16 %v1971
  %v2060 = vunpack.c.l.b16 %v1972
  %v2061 = vunpack.c.l.b16 %v1973
  %v2062 = vunpack.c.l.b16 %v1974
  %v2063 = vunpack.c.l.b16 %v1975
  %v2064 = vunpack.c.l.b16 %v1976
  %v2065 = vunpack.c.l.b16 %v1977
  %v2066 = vunpack.c.l.b16 %v1978
  %v2067 = vunpack.c.l.b16 %v1979
  %v2068 = vunpack.c.l.b16 %v1980
  %v2069 = vunpack.c.l.b16 %v1981
  %v2070 = vunpack.c.l.b16 %v1982
  %v2071 = vunpack.c.l.b16 %v1983
  %v2072 = vunpack.c.l.b16 %v1984
  %v2073 = vpack.c.b16 %v2058, %v2057
  %v2074 = vpack.c.b16 %v2060, %v2059
  %v2075 = vpack.c.b16 %v2062, %v2061
  %v2076 = vpack.c.b16 %v2064, %v2063
  %v2077 = vpack.c.b16 %v2066, %v2065
  %v2078 = vpack.c.b16 %v2068, %v2067
  %v2079 = vpack.c.b16 %v2070, %v2069
  %v2080 = vpack.c.b16 %v2072, %v2071
  %2089 = vmatprep.subr.bf16.mxu0 0
  %2090 = vmatpush1.bf16.msra.mxu0 %v2073
  %2091 = vmatprep.subr.bf16.mxu0 0
  %2092 = vmatpush1.bf16.msra.mxu0 %v2074
  %2093 = vmatprep.subr.bf16.mxu0 0
  %2094 = vmatpush1.bf16.msra.mxu0 %v2075
  %2095 = vmatprep.subr.bf16.mxu0 0
  %2096 = vmatpush1.bf16.msra.mxu0 %v2076
  %2097 = vmatprep.subr.bf16.mxu0 0
  %2098 = vmatpush1.bf16.msra.mxu0 %v2077
  %2099 = vmatprep.subr.bf16.mxu0 0
  %2100 = vmatpush1.bf16.msra.mxu0 %v2078
  %2101 = vmatprep.subr.bf16.mxu0 0
  %2102 = vmatpush1.bf16.msra.mxu0 %v2079
  %2103 = vmatprep.subr.bf16.mxu0 0
  %2104 = vmatpush1.bf16.msra.mxu0 %v2080
  %2105 = vmatprep.subr.bf16.mxu0 0
  %2106 = vmatpush1.bf16.msra.mxu0 0
  %2107 = vmatprep.subr.bf16.mxu0 0
  %2108 = vmatpush1.bf16.msra.mxu0 0
  %2109 = vmatprep.subr.bf16.mxu0 0
  %2110 = vmatpush1.bf16.msra.mxu0 0
  %2111 = vmatprep.subr.bf16.mxu0 0
  %2112 = vmatpush1.bf16.msra.mxu0 0
  %2113 = vmatprep.subr.bf16.mxu0 0
  %2114 = vmatpush1.bf16.msra.mxu0 0
  %2115 = vmatprep.subr.bf16.mxu0 0
  %2116 = vmatpush1.bf16.msra.mxu0 0
  %2117 = vmatprep.subr.bf16.mxu0 0
  %2118 = vmatpush1.bf16.msra.mxu0 0
  %2119 = vmatprep.subr.bf16.mxu0 0
  %2120 = vmatpush1.bf16.msra.mxu0 0
  %2121 = vmatprep.mubr.bf16.mxu0 0
  %2122 = vmatmul.mubr.bf16.gmra.mrb[0].mxu0 %v2039
  %v2123 = vpop.f32.mrb[0].mxu0
  %v2124 = vadd.f32 %v1985, %v2123
  %v2125 = vpop.f32.mrb[0].mxu0
  %v2126 = vpop.f32.mrb[0].mxu0
  %v2127 = vadd.f32 %v1985, %v2126
  %v2128 = vpop.f32.mrb[0].mxu0
  %2129 = vdwg.mxu0
  %v2130 = vlaneseq
  %v2131 = vand.u32 %v2130, 127
  %vm2132 = vcmp.lt.s32.totalorder %v2131, 2
  %v2133 = vsel %vm2132, %v2124, -1e+30
  %v2134 = vsel %vm2132, %v2127, -1e+30
  %2135 = vmax.xlane.f32.xlu0 %v2133
  %v2136 = vpop.xlane.xlu0 %2135
  %2137 = vmax.xlane.f32.xlu0 %v2134
  %v2138 = vpop.xlane.xlu0 %2137
  %v2139 = vsub.f32 %v2133, %v2136
  %v2140 = vsub.f32 %v2134, %v2138
  %v2141 = vmul.f32 %v2139, 1.442695
  %v2142 = vpow.pop %v2141
  %v2143 = vmul.f32 %v2140, 1.442695
  %v2144 = vpow.pop %v2143
  %2145 = vadd.xlane.f32.xlu0 %v2142
  %v2146 = vpop.xlane.xlu0 %2145
  %2147 = vadd.xlane.f32.xlu0 %v2144
  %v2148 = vpop.xlane.xlu0 %2147
  %v2149 = vrcp.pop %v2146
  %v2150 = vrcp.pop %v2148
  %v2151 = vmul.f32 %v2142, %v2149
  %v2152 = vmul.f32 %v2144, %v2150
  %2153 = vst [vmem:[%s4] sm:$0xff] %v2151
  %2154 = vst [vmem:[%s4 + $0x8] sm:$0xff] %v2152
  // Predicated region
  $region18: #{siamese_forward.1} parent=0 // pred_check
    _
  $region19: #{siamese_forward.1} parent=0 // pred_check_branch
    %2156 = sbr.rel (0) target = $region21
  $region20: #{siamese_forward.1} parent=0 // pred_region
    _
  $region21: #{siamese_forward.1} parent=0 // pred_fallthru
    _
  // Predicated region
  $region22: #{siamese_forward.1} parent=0 // pred_check
    _
  $region23: #{siamese_forward.1} parent=0 // pred_check_branch
    %2158 = sbr.rel (0) target = $region25
  $region24: #{siamese_forward.1} parent=0 // pred_region
    _
  $region25: #{siamese_forward.1} parent=0 // pred_fallthru
    _

</llo_original>
